<compile_context>
chip_gen: v6e
topology: v6e:2x2x1
jax: 0.10.0
libtpu: 0.0.40
codegen_flags: <defaults>
</compile_context>

<pallas_src>
import functools

import jax
import jax.numpy as jnp
from jax.experimental import pallas as pl
from jax.experimental.pallas import tpu as pltpu


# --------------------------------------------------------------------------
# Activations (PyTorch semantics)
# --------------------------------------------------------------------------
def _softplus(x, beta):
    inv_beta = 1.0 / beta                 # python constant -> plain VPU multiply
    bx = beta * x
    safe = jnp.minimum(bx, 20.0)          # overflow guard for exp
    return jnp.where(bx > 20.0, x, jnp.log1p(jnp.exp(safe)) * inv_beta)


def make_activation(name, beta):
    if name == "Softplus":
        return functools.partial(_softplus, beta=beta)
    if name == "ReLU":
        return lambda x: jnp.maximum(x, 0.0)
    if name == "LeakyReLU":
        return lambda x: jnp.where(x >= 0, x, 0.01 * x)
    if name == "Tanh":
        return jnp.tanh
    if name == "Sigmoid":
        return lambda x: 1.0 / (1.0 + jnp.exp(-x))
    if name == "ELU":
        return lambda x: jnp.where(x > 0, x, jnp.exp(x) - 1.0)
    if name == "PReLU":
        # TODO(synk): nn.PReLU's negative slope is learnable; use its default
        # init (0.25) here instead of threading the parameter through.
        return lambda x: jnp.where(x >= 0, x, 0.25 * x)
    raise ValueError(f"Unsupported activation: {name!r}")


def _round_up(v, m):
    return -(-v // m) * m


# --------------------------------------------------------------------------
# Pallas kernel
# --------------------------------------------------------------------------
def _make_kernel(in_dim, pad_in, d_outs, Ks, col_off, act_fn):
    """Refs: (x_ref, wpack_ref, bpack_ref, out_ref, cat_ref)

    x_ref    : (tb, in_dim)                        native batch-major x tile
    wpack_ref: (max_dout, total_cols) f32          all layer weights, transposed,
               layer l at columns [col_off[l] : col_off[l] + Ks[l]]
    bpack_ref: (max_dout, n_layers)   f32          bias of layer l in column l
    out_ref  : (out_dim, tb)                       lane-dense output tile
    cat_ref  : (R, tb) f32 VMEM scratch            rows [0:pad_in] = act(x) (+pad),
               rows [pad_in : pad_in + d_prev] = current hidden activation
    """
    n_layers = len(d_outs)

    def kernel(x_ref, wpack_ref, bpack_ref, out_ref, cat_ref):
        f32 = jnp.float32
        tb = x_ref.shape[0]

        # One in-kernel transpose (XLU) -> batch-on-lanes layout for everything
        # downstream; pad feature rows up to a sublane-aligned count with zeros
        # (the matching weight columns are zero, so the pad never contributes).
        x_t = x_ref[...].astype(f32).T                               # (in_dim, tb)
        if pad_in > in_dim:
            x_t = jnp.concatenate(
                [x_t, jnp.zeros((pad_in - in_dim, tb), f32)], axis=0)  # (pad_in, tb)

        # act(x_target), reused by every concat layer, written once per step.
        cat_ref[0:pad_in, :] = act_fn(x_t)

        # Layer 0: Linear(in_dim, hidden) on raw x, then (folded-concat) act.
        w0 = wpack_ref[0:d_outs[0], col_off[0]:col_off[0] + Ks[0]]   # (hidden, pad_in)
        b0 = bpack_ref[0:d_outs[0], 0:1]                             # (hidden, 1)
        h0 = act_fn(jnp.dot(w0, x_t, preferred_element_type=f32) + b0)
        cat_ref[pad_in:pad_in + d_outs[0], :] = h0

        # Hidden layers + final layer: one merged dot per layer over the
        # concat scratch [act(x) | h_prev]; final layer has no activation.
        for l in range(1, n_layers):
            w = wpack_ref[0:d_outs[l], col_off[l]:col_off[l] + Ks[l]]
            b = bpack_ref[0:d_outs[l], l:l + 1]
            pre = jnp.dot(w, cat_ref[0:Ks[l], :],
                          preferred_element_type=f32) + b
            if l < n_layers - 1:
                cat_ref[pad_in:pad_in + d_outs[l], :] = act_fn(pre)
            else:
                out_ref[...] = pre.astype(out_ref.dtype)

    return kernel


# --------------------------------------------------------------------------
# Batch-tile selection (VMEM-budget driven, generation-agnostic but v7x aware)
# --------------------------------------------------------------------------
def _bytes_per_batch_row(in_dim, out_dim, r_scratch, max_dout):
    x_tile = _round_up(in_dim, 128) * 4 * 2      # lane-padded, double-buffered
    out_tile = _round_up(out_dim, 8) * 4 * 2     # sublane-padded, double-buffered
    scratch = r_scratch * 4                      # persistent concat scratch
    live = 3 * _round_up(max_dout, 8) * 4        # pre-act / act temporaries
    return x_tile + out_tile + scratch + live + 64


def _pick_block_b(B, bytes_per_row, vmem_budget_bytes=20 << 20, cap=8192):
    """Largest lane-aligned batch tile that divides B and fits the VMEM budget.
    If that yields a single grid step, split into 2 so the 'parallel' batch
    axis can shard across both TensorCores on v7x (near-free on v5e/v6e)."""
    if B <= 256:
        return B
    limit = max(128, min(cap,
                         (vmem_budget_bytes // max(bytes_per_row, 1)) // 128 * 128))
    tb = None
    for cand in range(min(limit, (B // 128) * 128), 127, -128):
        if B % cand == 0:
            tb = cand
            break
    if tb is None:
        return B                                   # awkward batch: single full tile
    if B // tb < 2 and B % 256 == 0 and B // 2 >= 512:
        tb = B // 2
    return tb


# --------------------------------------------------------------------------
# Wrapper
# --------------------------------------------------------------------------
def concat_mlp_pallas(x, params, *, in_dim, n_hidden_layers, beta,
                      activation="Softplus", block_b=None):
    """x: (B, in_dim).  params: list of (W, b) with W shaped (d_in, d_out)
    (transposed vs. torch.nn.Linear storage; identical math)."""
    B, xd = x.shape
    assert xd == in_dim
    n_layers = len(params)
    assert n_layers == n_hidden_layers + 2

    d_outs = [w.shape[1] for (w, _) in params]          # per-layer output widths
    out_dim = d_outs[-1]
    pad_in = _round_up(in_dim, 8)                        # sublane-aligned x rows
    r_scratch = _round_up(pad_in + max(d_outs[:-1]), 8)  # concat scratch rows
    max_dout = max(d_outs)

    # Per-layer contraction sizes as seen by the kernel.
    Ks = [pad_in] + [pad_in + d_outs[l - 1] for l in range(1, n_layers)]
    col_off, c = [], 0
    for K in Ks:
        col_off.append(c)
        c += _round_up(K, 128)                           # lane-aligned slab starts
    total_cols = c

    # Pack all weights/biases into two constant operands (f32).
    wpack = jnp.zeros((max_dout, total_cols), jnp.float32)
    bpack = jnp.zeros((max_dout, n_layers), jnp.float32)
    w0, b0 = params[0]                                   # (in_dim, hidden), (hidden,)
    wpack = wpack.at[0:d_outs[0], col_off[0]:col_off[0] + in_dim].set(
        w0.T.astype(jnp.float32))
    bpack = bpack.at[0:d_outs[0], 0].set(b0.astype(jnp.float32))
    for l in range(1, n_layers):
        w, b = params[l]                                 # (in_dim + d_prev, d_out)
        d_out, d_prev = d_outs[l], d_outs[l - 1]
        wpack = wpack.at[0:d_out, col_off[l]:col_off[l] + in_dim].set(
            w[:in_dim, :].T.astype(jnp.float32))
        wpack = wpack.at[0:d_out,
                         col_off[l] + pad_in:col_off[l] + pad_in + d_prev].set(
            w[in_dim:, :].T.astype(jnp.float32))
        bpack = bpack.at[0:d_out, l].set(b.astype(jnp.float32))

    tb = (_pick_block_b(B, _bytes_per_batch_row(in_dim, out_dim, r_scratch, max_dout))
          if block_b is None else block_b)
    assert B % tb == 0, (B, tb)

    act_fn = make_activation(activation, beta)
    kernel = _make_kernel(in_dim, pad_in, d_outs, Ks, col_off, act_fn)

    out_t = pl.pallas_call(
        kernel,
        out_shape=jax.ShapeDtypeStruct((out_dim, B), x.dtype),
        grid_spec=pltpu.PrefetchScalarGridSpec(
            num_scalar_prefetch=0,
            grid=(B // tb,),
            in_specs=[
                pl.BlockSpec((tb, in_dim), lambda i: (i, 0)),     # x, native layout
                pl.BlockSpec(wpack.shape, lambda i: (0, 0)),      # packed weights
                pl.BlockSpec(bpack.shape, lambda i: (0, 0)),      # packed biases
            ],
            out_specs=pl.BlockSpec((out_dim, tb), lambda i: (0, i)),
            scratch_shapes=[pltpu.VMEM((r_scratch, tb), jnp.float32)],
        ),
        compiler_params=pltpu.CompilerParams(
            dimension_semantics=("parallel",),        # batch axis -> megacore (v7x)
            vmem_limit_bytes=32 * 1024 * 1024,        # within physical on v5e/v6e/v7x
        ),
    )(x, wpack, bpack)

    return out_t.T                                        # (B, out_dim)


# --------------------------------------------------------------------------
# Pure-JAX reference (mirrors the PyTorch forward literally, with concat)
# --------------------------------------------------------------------------
def concat_mlp_ref(x, params, *, beta):
    x_target = x
    n = len(params)
    for i, (w, b) in enumerate(params):
        x = x @ w + b
        if i < n - 1:
            x = jnp.concatenate((x_target, x), axis=1)
            x = _softplus(x, beta)
    return x


# --------------------------------------------------------------------------
# Deterministic parameter construction (shapes from ConcatMLP.__init__,
# concat=True branch)
# --------------------------------------------------------------------------
def init_params(key, in_dim, hidden_dim, out_dim, n_hidden_layers):
    dims = [(in_dim, hidden_dim)]
    h_dim_concat = in_dim + hidden_dim
    for _ in range(n_hidden_layers):
        dims.append((h_dim_concat, h_dim_concat))
        h_dim_concat = in_dim + h_dim_concat
    dims.append((h_dim_concat, out_dim))

    params = []
    for (d_in, d_out) in dims:
        key, kw, kb = jax.random.split(key, 3)
        bound = 1.0 / (d_in ** 0.5)
        w = jax.random.uniform(kw, (d_in, d_out), jnp.float32, -bound, bound)
        b = jax.random.uniform(kb, (d_out,), jnp.float32, -bound, bound)
        params.append((w, b))
    return params


if __name__ == "__main__":
    # coords + fault features -> scalar; small, multi-step grid for the demo
    batch = 1024
    in_dim = 4
    hidden_dim = 32
    out_dim = 1
    n_hidden_layers = 2
    beta = 100.0        # Softplus beta

    key = jax.random.PRNGKey(0)
    kx, kp = jax.random.split(key)
    x = jax.random.normal(kx, (batch, in_dim), jnp.float32)
    params = init_params(kp, in_dim, hidden_dim, out_dim, n_hidden_layers)

    out = concat_mlp_pallas(
        x, params, in_dim=in_dim, n_hidden_layers=n_hidden_layers, beta=beta
    )
    out = jax.block_until_ready(out)

    ref = concat_mlp_ref(x, params, beta=beta)
    assert out.shape == (batch, out_dim)
    assert jnp.allclose(out, ref, atol=1e-4, rtol=1e-4)

    print("KERNEL_OK")
</pallas_src>

<mosaic_0001>
module attributes {stable_mosaic.version = 11 : i64} {
  func.func @kernel(%arg0: i32, %arg1: memref<512x4xf32, #tpu.memory_space<vmem>>, %arg2: memref<40x512xf32, #tpu.memory_space<vmem>>, %arg3: memref<40x4xf32, #tpu.memory_space<vmem>>, %arg4: memref<1x512xf32, #tpu.memory_space<vmem>>, %arg5: memref<48x512xf32, #tpu.memory_space<vmem>>) attributes {dimension_semantics = [#tpu.dimension_semantics<parallel>], iteration_bounds = array<i64: 2>, scalar_prefetch = 0 : i64, scratch_operands = 1 : i64, tpu.core_type = #tpu.core_type<tc>, window_params = [{transform_indices = @transform_0, window_bounds = array<i64: 512, 4>}, {pipeline_mode = #tpu.pipeline_mode<synchronous>, transform_indices = @transform_1, window_bounds = array<i64: 40, 512>}, {pipeline_mode = #tpu.pipeline_mode<synchronous>, transform_indices = @transform_2, window_bounds = array<i64: 40, 4>}, {transform_indices = @transform_3, window_bounds = array<i64: 1, 512>}]} {
    %c0 = arith.constant 0 : index
    %c0_0 = arith.constant 0 : index
    %0 = vector.load %arg1[%c0, %c0_0] : memref<512x4xf32, #tpu.memory_space<vmem>>, vector<512x4xf32>
    %1 = tpu.transpose %0, [1, 0] : vector<512x4xf32> -> vector<4x512xf32>
    %cst = arith.constant 0.000000e+00 : f32
    %2 = vector.broadcast %cst : f32 to vector<4x512xf32>
    %3 = tpu.concatenate %1, %2 in 0 : vector<4x512xf32>, vector<4x512xf32> -> vector<8x512xf32>
    %cst_1 = arith.constant 1.000000e+02 : f32
    %4 = vector.broadcast %cst_1 : f32 to vector<8x512xf32>
    %5 = arith.mulf %4, %3 : vector<8x512xf32>
    %cst_2 = arith.constant 2.000000e+01 : f32
    %6 = vector.broadcast %cst_2 : f32 to vector<8x512xf32>
    %7 = arith.minimumf %5, %6 : vector<8x512xf32>
    %cst_3 = arith.constant 2.000000e+01 : f32
    %8 = vector.broadcast %cst_3 : f32 to vector<8x512xf32>
    %9 = arith.cmpf ogt, %5, %8 : vector<8x512xf32>
    %10 = math.exp %7 : vector<8x512xf32>
    %11 = math.log1p %10 : vector<8x512xf32>
    %cst_4 = arith.constant 0.00999999977 : f32
    %12 = vector.broadcast %cst_4 : f32 to vector<8x512xf32>
    %13 = arith.mulf %11, %12 : vector<8x512xf32>
    %14 = arith.select %9, %3, %13 : vector<8x512xi1>, vector<8x512xf32>
    %c0_5 = arith.constant 0 : index
    %c0_6 = arith.constant 0 : index
    %15 = vector.load %arg5[%c0_5, %c0_6] : memref<48x512xf32, #tpu.memory_space<vmem>>, vector<8x512xf32>
    tpu.vector_store %arg5[%c0_5, %c0_6], %14 {strides = array<i32>} : memref<48x512xf32, #tpu.memory_space<vmem>>, vector<8x512xf32>,
    %c0_7 = arith.constant 0 : index
    %c0_8 = arith.constant 0 : index
    %16 = vector.load %arg2[%c0_7, %c0_8] : memref<40x512xf32, #tpu.memory_space<vmem>>, vector<32x8xf32>
    %c0_9 = arith.constant 0 : index
    %c0_10 = arith.constant 0 : index
    %17 = vector.load %arg3[%c0_9, %c0_10] : memref<40x4xf32, #tpu.memory_space<vmem>>, vector<32x1xf32>
    %cst_11 = arith.constant dense<0.000000e+00> : vector<32x512xf32>
    %18 = tpu.matmul %16, %3, %cst_11 {dimension_numbers = #tpu.dot_dimension_numbers<[1], [0], [0], [1], [0, 0, 1, 1], [], []>} : vector<32x8xf32>, vector<8x512xf32>, vector<32x512xf32> -> vector<32x512xf32>
    %19 = vector.broadcast %17 : vector<32x1xf32> to vector<32x512xf32>
    %20 = arith.addf %18, %19 : vector<32x512xf32>
    %cst_12 = arith.constant 1.000000e+02 : f32
    %21 = vector.broadcast %cst_12 : f32 to vector<32x512xf32>
    %22 = arith.mulf %21, %20 : vector<32x512xf32>
    %cst_13 = arith.constant 2.000000e+01 : f32
    %23 = vector.broadcast %cst_13 : f32 to vector<32x512xf32>
    %24 = arith.minimumf %22, %23 : vector<32x512xf32>
    %cst_14 = arith.constant 2.000000e+01 : f32
    %25 = vector.broadcast %cst_14 : f32 to vector<32x512xf32>
    %26 = arith.cmpf ogt, %22, %25 : vector<32x512xf32>
    %27 = math.exp %24 : vector<32x512xf32>
    %28 = math.log1p %27 : vector<32x512xf32>
    %cst_15 = arith.constant 0.00999999977 : f32
    %29 = vector.broadcast %cst_15 : f32 to vector<32x512xf32>
    %30 = arith.mulf %28, %29 : vector<32x512xf32>
    %31 = arith.select %26, %20, %30 : vector<32x512xi1>, vector<32x512xf32>
    %c8 = arith.constant 8 : index
    %c0_16 = arith.constant 0 : index
    %32 = vector.load %arg5[%c8, %c0_16] : memref<48x512xf32, #tpu.memory_space<vmem>>, vector<32x512xf32>
    tpu.vector_store %arg5[%c8, %c0_16], %31 {strides = array<i32>} : memref<48x512xf32, #tpu.memory_space<vmem>>, vector<32x512xf32>,
    %c0_17 = arith.constant 0 : index
    %c128 = arith.constant 128 : index
    %33 = vector.load %arg2[%c0_17, %c128] : memref<40x512xf32, #tpu.memory_space<vmem>>, vector<36x40xf32>
    %c0_18 = arith.constant 0 : index
    %c1 = arith.constant 1 : index
    %34 = vector.load %arg3[%c0_18, %c1] : memref<40x4xf32, #tpu.memory_space<vmem>>, vector<36x1xf32>
    %c0_19 = arith.constant 0 : index
    %c0_20 = arith.constant 0 : index
    %35 = vector.load %arg5[%c0_19, %c0_20] : memref<48x512xf32, #tpu.memory_space<vmem>>, vector<40x512xf32>
    %cst_21 = arith.constant dense<0.000000e+00> : vector<36x512xf32>
    %36 = tpu.matmul %33, %35, %cst_21 {dimension_numbers = #tpu.dot_dimension_numbers<[1], [0], [0], [1], [0, 0, 1, 1], [], []>} : vector<36x40xf32>, vector<40x512xf32>, vector<36x512xf32> -> vector<36x512xf32>
    %37 = vector.broadcast %34 : vector<36x1xf32> to vector<36x512xf32>
    %38 = arith.addf %36, %37 : vector<36x512xf32>
    %cst_22 = arith.constant 1.000000e+02 : f32
    %39 = vector.broadcast %cst_22 : f32 to vector<36x512xf32>
    %40 = arith.mulf %39, %38 : vector<36x512xf32>
    %cst_23 = arith.constant 2.000000e+01 : f32
    %41 = vector.broadcast %cst_23 : f32 to vector<36x512xf32>
    %42 = arith.minimumf %40, %41 : vector<36x512xf32>
    %cst_24 = arith.constant 2.000000e+01 : f32
    %43 = vector.broadcast %cst_24 : f32 to vector<36x512xf32>
    %44 = arith.cmpf ogt, %40, %43 : vector<36x512xf32>
    %45 = math.exp %42 : vector<36x512xf32>
    %46 = math.log1p %45 : vector<36x512xf32>
    %cst_25 = arith.constant 0.00999999977 : f32
    %47 = vector.broadcast %cst_25 : f32 to vector<36x512xf32>
    %48 = arith.mulf %46, %47 : vector<36x512xf32>
    %49 = arith.select %44, %38, %48 : vector<36x512xi1>, vector<36x512xf32>
    %c8_26 = arith.constant 8 : index
    %c0_27 = arith.constant 0 : index
    %50 = vector.load %arg5[%c8_26, %c0_27] : memref<48x512xf32, #tpu.memory_space<vmem>>, vector<36x512xf32>
    tpu.vector_store %arg5[%c8_26, %c0_27], %49 {strides = array<i32>} : memref<48x512xf32, #tpu.memory_space<vmem>>, vector<36x512xf32>,
    %c0_28 = arith.constant 0 : index
    %c256 = arith.constant 256 : index
    %51 = vector.load %arg2[%c0_28, %c256] : memref<40x512xf32, #tpu.memory_space<vmem>>, vector<40x44xf32>
    %c0_29 = arith.constant 0 : index
    %c2 = arith.constant 2 : index
    %52 = vector.load %arg3[%c0_29, %c2] : memref<40x4xf32, #tpu.memory_space<vmem>>, vector<40x1xf32>
    %c0_30 = arith.constant 0 : index
    %c0_31 = arith.constant 0 : index
    %53 = vector.load %arg5[%c0_30, %c0_31] : memref<48x512xf32, #tpu.memory_space<vmem>>, vector<44x512xf32>
    %cst_32 = arith.constant dense<0.000000e+00> : vector<40x512xf32>
    %54 = tpu.matmul %51, %53, %cst_32 {dimension_numbers = #tpu.dot_dimension_numbers<[1], [0], [0], [1], [0, 0, 1, 1], [], []>} : vector<40x44xf32>, vector<44x512xf32>, vector<40x512xf32> -> vector<40x512xf32>
    %55 = vector.broadcast %52 : vector<40x1xf32> to vector<40x512xf32>
    %56 = arith.addf %54, %55 : vector<40x512xf32>
    %cst_33 = arith.constant 1.000000e+02 : f32
    %57 = vector.broadcast %cst_33 : f32 to vector<40x512xf32>
    %58 = arith.mulf %57, %56 : vector<40x512xf32>
    %cst_34 = arith.constant 2.000000e+01 : f32
    %59 = vector.broadcast %cst_34 : f32 to vector<40x512xf32>
    %60 = arith.minimumf %58, %59 : vector<40x512xf32>
    %cst_35 = arith.constant 2.000000e+01 : f32
    %61 = vector.broadcast %cst_35 : f32 to vector<40x512xf32>
    %62 = arith.cmpf ogt, %58, %61 : vector<40x512xf32>
    %63 = math.exp %60 : vector<40x512xf32>
    %64 = math.log1p %63 : vector<40x512xf32>
    %cst_36 = arith.constant 0.00999999977 : f32
    %65 = vector.broadcast %cst_36 : f32 to vector<40x512xf32>
    %66 = arith.mulf %64, %65 : vector<40x512xf32>
    %67 = arith.select %62, %56, %66 : vector<40x512xi1>, vector<40x512xf32>
    %c8_37 = arith.constant 8 : index
    %c0_38 = arith.constant 0 : index
    %68 = vector.load %arg5[%c8_37, %c0_38] : memref<48x512xf32, #tpu.memory_space<vmem>>, vector<40x512xf32>
    tpu.vector_store %arg5[%c8_37, %c0_38], %67 {strides = array<i32>} : memref<48x512xf32, #tpu.memory_space<vmem>>, vector<40x512xf32>,
    %c0_39 = arith.constant 0 : index
    %c384 = arith.constant 384 : index
    %69 = vector.load %arg2[%c0_39, %c384] : memref<40x512xf32, #tpu.memory_space<vmem>>, vector<1x48xf32>
    %c0_40 = arith.constant 0 : index
    %c3 = arith.constant 3 : index
    %70 = vector.load %arg3[%c0_40, %c3] : memref<40x4xf32, #tpu.memory_space<vmem>>, vector<1x1xf32>
    %c0_41 = arith.constant 0 : index
    %c0_42 = arith.constant 0 : index
    %71 = vector.load %arg5[%c0_41, %c0_42] : memref<48x512xf32, #tpu.memory_space<vmem>>, vector<48x512xf32>
    %cst_43 = arith.constant dense<0.000000e+00> : vector<1x512xf32>
    %72 = tpu.matmul %69, %71, %cst_43 {dimension_numbers = #tpu.dot_dimension_numbers<[1], [0], [0], [1], [0, 0, 1, 1], [], []>} : vector<1x48xf32>, vector<48x512xf32>, vector<1x512xf32> -> vector<1x512xf32>
    %73 = vector.broadcast %70 : vector<1x1xf32> to vector<1x512xf32>
    %74 = arith.addf %72, %73 : vector<1x512xf32>
    %c0_44 = arith.constant 0 : index
    %c0_45 = arith.constant 0 : index
    %75 = vector.load %arg4[%c0_44, %c0_45] : memref<1x512xf32, #tpu.memory_space<vmem>>, vector<1x512xf32>
    tpu.vector_store %arg4[%c0_44, %c0_45], %74 {strides = array<i32>} : memref<1x512xf32, #tpu.memory_space<vmem>>, vector<1x512xf32>,
    return
  }
  func.func @transform_0(%arg0: i32) -> (i32, i32) {
    %c0_i32 = arith.constant 0 : i32
    %c0_i32_0 = arith.constant 0 : i32
    return %arg0, %c0_i32 : i32, i32
  }
  func.func @transform_1(%arg0: i32) -> (i32, i32) {
    %c0_i32 = arith.constant 0 : i32
    %c0_i32_0 = arith.constant 0 : i32
    %c0_i32_1 = arith.constant 0 : i32
    return %c0_i32, %c0_i32_0 : i32, i32
  }
  func.func @transform_2(%arg0: i32) -> (i32, i32) {
    %c0_i32 = arith.constant 0 : i32
    %c0_i32_0 = arith.constant 0 : i32
    %c0_i32_1 = arith.constant 0 : i32
    return %c0_i32, %c0_i32_0 : i32, i32
  }
  func.func @transform_3(%arg0: i32) -> (i32, i32) {
    %c0_i32 = arith.constant 0 : i32
    %c0_i32_0 = arith.constant 0 : i32
    return %c0_i32, %arg0 : i32, i32
  }
}

</mosaic_0001>

<llo_original>
// kernel: tpu_custom_call.1
$region0: #{tpu_custom_call.1}
  #allocation0 [shape = 'u32[]', space=smem, size = 0x4, offset = 0x4, fixed_abs, tag = 'smem constant byte address 0x4 - core index']
  #allocation1 [shape = 'u32[144,128]{1,0:T(1,128)}', space=vmem, size = 0x12000, scoped, tag = 'internal scratch']
  #allocation2 [shape = 'f32[48,512]{1,0:T(8,128)}', space=vmem, size = 0x18000, scoped, tag = 'scratch operand']
  %s0 = inlined_call_operand.vmem [shape: f32[1024,4], index: 0, kind: input, shape index: {}]
  %s1 = inlined_call_operand.vmem [shape: f32[40,512], index: 1, kind: input, shape index: {}]
  %s2 = inlined_call_operand.vmem [shape: f32[40,4], index: 2, kind: input, shape index: {}]
  %s3 = inlined_call_operand.hbm [shape: f32[1,1024], index: 3, kind: output, shape index: {}]
  %s4 = sld [smem:[#allocation0]]
  $region45: #{tpu_custom_call.1} parent=0
    _
  %s6 = ssub.s32 1, %s4
  %s7 = scalar_select 0, %s6, %s4
  $region1: #{tpu_custom_call.1} parent=0
    #allocation3 [shape = 'u8[4096]{0}', space=vmem, size = 0x1000, scoped, tag = 'output window, operand 0']
    #allocation4 [shape = 's32[2]{0}', space=sflag, size = 0x8, scoped, tag = 'scoped memory for tpu_custom_call.1']
    %8 = vsyncpa [#allocation4], 0
    %s9 = scalar_lea.sflag [#allocation4], 1
    %10 = vsyncpa %s9, 0
    loop: start=0, step=1, limit=4
    $region2: #{tpu_custom_call.1} parent=1 // loop_pre_header
      _
    $region3: #{tpu_custom_call.1} parent=1 // loop_header
      %s12 = sphi 0, %s16
      %p13 = scmp.ge.s32.totalorder %s12, 4
      %s22 = sphi 0, %s24
      %s25 = sphi 0, %s22
      %s26 = sphi 0, %s25
      %s42 = sphi 0, %s26
      %s46 = sphi 0, %s46
      %s48 = sphi 0, %s46
      %s49 = sphi 0, %s48
      %s63 = sphi 0, %s49
      %s67 = sphi 0, %s67
      %s69 = sphi 0, %s67
      %s70 = sphi 0, %s69
      %s84 = sphi 0, %s70
      %s90 = sphi 0, %s92
      %s93 = sphi 0, %s90
      %s94 = sphi 0, %s93
      %s110 = sphi 0, %s94
    $region4: #{tpu_custom_call.1} parent=1 // loop_header_branch
      %15 = sbr.rel (%p13) target = $region8
    $region5: #{tpu_custom_call.1} parent=1 // loop_body
      %s17 = ssub.s32 %s12, 1
      %s18 = ssub.s32 %s12, 2
      %s19 = sadd.s32 %s12, 1
      %s20 = ssub.s32 %s12, %s19
      %p21 = scmp.eq.s32.totalorder %s20, 0
      %s23 = sadd.s32 %s22, 1
      %s24 = scalar_select %p21, %s22, %s23
      %p27 = pneg %p21
      %p28 = scmp.eq.s32.totalorder %s12, 1
      %p29 = por %p27, %p28
      %p30 = scmp.ne.s32.totalorder %s22, %s25
      %p31 = scmp.eq.s32.totalorder %s12, 0
      %p32 = por %p30, %p31
      %p33 = scmp.ne.s32.totalorder %s22, %s25
      %p34 = scmp.eq.s32.totalorder %s17, 1
      %p35 = por %p33, %p34
      %p36 = scmp.ne.s32.totalorder %s25, %s26
      %p37 = scmp.eq.s32.totalorder %s17, 0
      %p38 = por %p36, %p37
      %p39 = scmp.ne.s32.totalorder %s25, %s26
      %p40 = scmp.eq.s32.totalorder %s18, 1
      %p41 = por %p39, %p40
      %p43 = scmp.ne.s32.totalorder %s26, %s42
      %p44 = scmp.eq.s32.totalorder %s18, 0
      %p45 = por %p43, %p44
      %s47 = sadd.s32 %s46, 1
      %p50 = scmp.eq.s32.totalorder %s12, 1
      %p51 = scmp.ne.s32.totalorder %s46, %s48
      %p52 = scmp.eq.s32.totalorder %s12, 0
      %p53 = por %p51, %p52
      %p54 = scmp.ne.s32.totalorder %s46, %s48
      %p55 = scmp.eq.s32.totalorder %s17, 1
      %p56 = por %p54, %p55
      %p57 = scmp.ne.s32.totalorder %s48, %s49
      %p58 = scmp.eq.s32.totalorder %s17, 0
      %p59 = por %p57, %p58
      %p60 = scmp.ne.s32.totalorder %s48, %s49
      %p61 = scmp.eq.s32.totalorder %s18, 1
      %p62 = por %p60, %p61
      %p64 = scmp.ne.s32.totalorder %s49, %s63
      %p65 = scmp.eq.s32.totalorder %s18, 0
      %p66 = por %p64, %p65
      %s68 = sadd.s32 %s67, 1
      %p71 = scmp.eq.s32.totalorder %s12, 1
      %p72 = scmp.ne.s32.totalorder %s67, %s69
      %p73 = scmp.eq.s32.totalorder %s12, 0
      %p74 = por %p72, %p73
      %p75 = scmp.ne.s32.totalorder %s67, %s69
      %p76 = scmp.eq.s32.totalorder %s17, 1
      %p77 = por %p75, %p76
      %p78 = scmp.ne.s32.totalorder %s69, %s70
      %p79 = scmp.eq.s32.totalorder %s17, 0
      %p80 = por %p78, %p79
      %p81 = scmp.ne.s32.totalorder %s69, %s70
      %p82 = scmp.eq.s32.totalorder %s18, 1
      %p83 = por %p81, %p82
      %p85 = scmp.ne.s32.totalorder %s70, %s84
      %p86 = scmp.eq.s32.totalorder %s18, 0
      %p87 = por %p85, %p86
      %s88 = ssub.s32 %s12, %s19
      %p89 = scmp.eq.s32.totalorder %s88, 0
      %s91 = sadd.s32 %s90, 1
      %s92 = scalar_select %p89, %s90, %s91
      %p95 = pneg %p89
      %p96 = scmp.eq.s32.totalorder %s12, 1
      %p97 = por %p95, %p96
      %p98 = scmp.ne.s32.totalorder %s90, %s93
      %p99 = scmp.eq.s32.totalorder %s12, 0
      %p100 = por %p98, %p99
      %p101 = scmp.ne.s32.totalorder %s90, %s93
      %p102 = scmp.eq.s32.totalorder %s17, 1
      %p103 = por %p101, %p102
      %p104 = scmp.ne.s32.totalorder %s93, %s94
      %p105 = scmp.eq.s32.totalorder %s17, 0
      %p106 = por %p104, %p105
      %p107 = scmp.ne.s32.totalorder %s93, %s94
      %p108 = scmp.eq.s32.totalorder %s18, 1
      %p109 = por %p107, %p108
      %p111 = scmp.ne.s32.totalorder %s94, %s110
      %p112 = scmp.eq.s32.totalorder %s18, 0
      %p113 = por %p111, %p112
      %p114 = scmp.le.s32.totalorder 1, %s12
      %p115 = scmp.lt.s32.totalorder %s12, 3
      %p116 = pnand %p114, %p115
      %p117 = pneg %p116
      // Predicated region
      $region9: #{tpu_custom_call.1} parent=5 // pred_check
        _
      $region10: #{tpu_custom_call.1} parent=5 // pred_check_branch
        %119 = sbr.rel (%p116) target = $region12
      $region11: #{tpu_custom_call.1} parent=5 // pred_region
        %s120 = ssub.s32 %s12, 1
        // Predicated region
        $region13: #{tpu_custom_call.1} parent=11 // pred_check
          %p121 = pneg %p59
        $region14: #{tpu_custom_call.1} parent=11 // pred_check_branch
          %123 = sbr.rel (%p121) target = $region16
        $region15: #{tpu_custom_call.1} parent=11 // pred_region
          _
        $region16: #{tpu_custom_call.1} parent=11 // pred_fallthru
          _
        // Predicated region
        $region17: #{tpu_custom_call.1} parent=11 // pred_check
          %p124 = pneg %p80
        $region18: #{tpu_custom_call.1} parent=11 // pred_check_branch
          %126 = sbr.rel (%p124) target = $region20
        $region19: #{tpu_custom_call.1} parent=11 // pred_region
          _
        $region20: #{tpu_custom_call.1} parent=11 // pred_fallthru
          _
      $region12: #{tpu_custom_call.1} parent=5 // pred_fallthru
        _
      %p127 = scmp.lt.s32.totalorder %s12, 2
      // Predicated region
      $region21: #{tpu_custom_call.1} parent=5 // pred_check
        %p128 = pneg %p127
      $region22: #{tpu_custom_call.1} parent=5 // pred_check_branch
        %130 = sbr.rel (%p128) target = $region24
      $region23: #{tpu_custom_call.1} parent=5 // pred_region
        // Predicated region
        $region25: #{tpu_custom_call.1} parent=23 // pred_check
          %p131 = pneg %p32
        $region26: #{tpu_custom_call.1} parent=23 // pred_check_branch
          %133 = sbr.rel (%p131) target = $region28
        $region27: #{tpu_custom_call.1} parent=23 // pred_region
          %s134 = smul.u32 64, %s12
          %p135 = scmp.lt.s32.totalorder %s134, 127
          %s136 = scalar_select %p135, %s134, 127
          %s137 = smul.addr %s136, 8
          %s138 = scalar_lea.vmem %s0, %s137
          %s139 = smul.u32 64, %s12
        $region28: #{tpu_custom_call.1} parent=23 // pred_fallthru
          _
      $region24: #{tpu_custom_call.1} parent=5 // pred_fallthru
        _
      %p140 = scmp.le.s32.totalorder 1, %s12
      %p141 = scmp.lt.s32.totalorder %s12, 3
      %p142 = pnand %p140, %p141
      %p143 = pneg %p142
      // Predicated region
      $region29: #{tpu_custom_call.1} parent=5 // pred_check
        _
      $region30: #{tpu_custom_call.1} parent=5 // pred_check_branch
        %145 = sbr.rel (%p142) target = $region32
      $region31: #{tpu_custom_call.1} parent=5 // pred_region
        %s146 = ssub.s32 %s12, 1
        %s147 = smul.u32 64, %s17
        %p148 = scmp.lt.s32.totalorder %s147, 127
        %s149 = scalar_select %p148, %s147, 127
        %s150 = smul.addr %s149, 8
        %s151 = scalar_lea.vmem %s0, %s150
        %p152 = pneg %p38
        %p153 = pneg %p35
        %p154 = pneg %p59
        %p155 = pneg %p56
        %p156 = pneg %p80
        %p157 = pneg %p77
        %p158 = pneg %p106
        %p159 = pneg %p103
        %s160 = sand.u32 %s93, 1
        %s161 = scalar_lea.sflag [#allocation4], %s160
        %s162 = sand.u32 %s93, 1
        %s163 = smul.addr %s162, 4
        %s164 = scalar_lea.vmem [#allocation3], %s163
        %s165 = smul.u32 64, %s17
        %p166 = scmp.lt.s32.totalorder %s165, 127
        %s167 = scalar_select %p166, %s165, 127
        %s168 = smul.addr %s167, 8
        %s169 = scalar_lea.vmem %s0, %s168
        %s170 = smul.u32 64, %s17
        %s171 = smul.u32 4, %s17
        %v172 = vld [vmem:[%s169] sm:$0xff]
        %v173 = vld [vmem:[%s169 + $0x8] sm:$0xff]
        %v174 = vld [vmem:[%s169 + $0x10] sm:$0xff]
        %v175 = vld [vmem:[%s169 + $0x18] sm:$0xff]
        %v176 = vld [vmem:[%s169 + $0x20] sm:$0xff]
        %v177 = vld [vmem:[%s169 + $0x28] sm:$0xff]
        %v178 = vld [vmem:[%s169 + $0x30] sm:$0xff]
        %v179 = vld [vmem:[%s169 + $0x38] sm:$0xff]
        %v180 = vld [vmem:[%s169 + $0x40] sm:$0xff]
        %v181 = vld [vmem:[%s169 + $0x48] sm:$0xff]
        %v182 = vld [vmem:[%s169 + $0x50] sm:$0xff]
        %v183 = vld [vmem:[%s169 + $0x58] sm:$0xff]
        %v184 = vld [vmem:[%s169 + $0x60] sm:$0xff]
        %v185 = vld [vmem:[%s169 + $0x68] sm:$0xff]
        %v186 = vld [vmem:[%s169 + $0x70] sm:$0xff]
        %v187 = vld [vmem:[%s169 + $0x78] sm:$0xff]
        %v188 = vld [vmem:[%s169 + $0x80] sm:$0xff]
        %v189 = vld [vmem:[%s169 + $0x88] sm:$0xff]
        %v190 = vld [vmem:[%s169 + $0x90] sm:$0xff]
        %v191 = vld [vmem:[%s169 + $0x98] sm:$0xff]
        %v192 = vld [vmem:[%s169 + $0xa0] sm:$0xff]
        %v193 = vld [vmem:[%s169 + $0xa8] sm:$0xff]
        %v194 = vld [vmem:[%s169 + $0xb0] sm:$0xff]
        %v195 = vld [vmem:[%s169 + $0xb8] sm:$0xff]
        %v196 = vld [vmem:[%s169 + $0xc0] sm:$0xff]
        %v197 = vld [vmem:[%s169 + $0xc8] sm:$0xff]
        %v198 = vld [vmem:[%s169 + $0xd0] sm:$0xff]
        %v199 = vld [vmem:[%s169 + $0xd8] sm:$0xff]
        %v200 = vld [vmem:[%s169 + $0xe0] sm:$0xff]
        %v201 = vld [vmem:[%s169 + $0xe8] sm:$0xff]
        %v202 = vld [vmem:[%s169 + $0xf0] sm:$0xff]
        %v203 = vld [vmem:[%s169 + $0xf8] sm:$0xff]
        %v204 = vld [vmem:[%s169 + $0x100] sm:$0xff]
        %v205 = vld [vmem:[%s169 + $0x108] sm:$0xff]
        %v206 = vld [vmem:[%s169 + $0x110] sm:$0xff]
        %v207 = vld [vmem:[%s169 + $0x118] sm:$0xff]
        %v208 = vld [vmem:[%s169 + $0x120] sm:$0xff]
        %v209 = vld [vmem:[%s169 + $0x128] sm:$0xff]
        %v210 = vld [vmem:[%s169 + $0x130] sm:$0xff]
        %v211 = vld [vmem:[%s169 + $0x138] sm:$0xff]
        %v212 = vld [vmem:[%s169 + $0x140] sm:$0xff]
        %v213 = vld [vmem:[%s169 + $0x148] sm:$0xff]
        %v214 = vld [vmem:[%s169 + $0x150] sm:$0xff]
        %v215 = vld [vmem:[%s169 + $0x158] sm:$0xff]
        %v216 = vld [vmem:[%s169 + $0x160] sm:$0xff]
        %v217 = vld [vmem:[%s169 + $0x168] sm:$0xff]
        %v218 = vld [vmem:[%s169 + $0x170] sm:$0xff]
        %v219 = vld [vmem:[%s169 + $0x178] sm:$0xff]
        %v220 = vld [vmem:[%s169 + $0x180] sm:$0xff]
        %v221 = vld [vmem:[%s169 + $0x188] sm:$0xff]
        %v222 = vld [vmem:[%s169 + $0x190] sm:$0xff]
        %v223 = vld [vmem:[%s169 + $0x198] sm:$0xff]
        %v224 = vld [vmem:[%s169 + $0x1a0] sm:$0xff]
        %v225 = vld [vmem:[%s169 + $0x1a8] sm:$0xff]
        %v226 = vld [vmem:[%s169 + $0x1b0] sm:$0xff]
        %v227 = vld [vmem:[%s169 + $0x1b8] sm:$0xff]
        %v228 = vld [vmem:[%s169 + $0x1c0] sm:$0xff]
        %v229 = vld [vmem:[%s169 + $0x1c8] sm:$0xff]
        %v230 = vld [vmem:[%s169 + $0x1d0] sm:$0xff]
        %v231 = vld [vmem:[%s169 + $0x1d8] sm:$0xff]
        %v232 = vld [vmem:[%s169 + $0x1e0] sm:$0xff]
        %v233 = vld [vmem:[%s169 + $0x1e8] sm:$0xff]
        %v234 = vld [vmem:[%s169 + $0x1f0] sm:$0xff]
        %v235 = vld [vmem:[%s169 + $0x1f8] sm:$0xff]
        %236 = vxpose.xlu0.b32.start [1/16] %v172, 128
        %237 = vxpose.xlu0.b32.cont [2/16] %v173, 128
        %238 = vxpose.xlu0.b32.cont [3/16] %v174, 128
        %239 = vxpose.xlu0.b32.cont [4/16] %v175, 128
        %240 = vxpose.xlu0.b32.cont [5/16] %v176, 128
        %241 = vxpose.xlu0.b32.cont [6/16] %v177, 128
        %242 = vxpose.xlu0.b32.cont [7/16] %v178, 128
        %243 = vxpose.xlu0.b32.cont [8/16] %v179, 128
        %244 = vxpose.xlu0.b32.cont [9/16] %v180, 128
        %245 = vxpose.xlu0.b32.cont [10/16] %v181, 128
        %246 = vxpose.xlu0.b32.cont [11/16] %v182, 128
        %247 = vxpose.xlu0.b32.cont [12/16] %v183, 128
        %248 = vxpose.xlu0.b32.cont [13/16] %v184, 128
        %249 = vxpose.xlu0.b32.cont [14/16] %v185, 128
        %250 = vxpose.xlu0.b32.cont [15/16] %v186, 128
        %251 = vxpose.xlu0.b32.end [16/16] %v187, 128
        %v252 = vpop.trf.xlu0
        %v253 = vpop.trf.xlu0
        %v254 = vpop.trf.xlu0
        %v255 = vpop.trf.xlu0
        %v256 = vpop.trf.xlu0
        %v257 = vpop.trf.xlu0
        %v258 = vpop.trf.xlu0
        %v259 = vpop.trf.xlu0
        %v260 = vpop.trf.xlu0
        %v261 = vpop.trf.xlu0
        %v262 = vpop.trf.xlu0
        %v263 = vpop.trf.xlu0
        %v264 = vpop.trf.xlu0
        %v265 = vpop.trf.xlu0
        %v266 = vpop.trf.xlu0
        %v267 = vpop.trf.xlu0
        %268 = vxpose.xlu0.b32.start [1/16] %v188, 128
        %269 = vxpose.xlu0.b32.cont [2/16] %v189, 128
        %270 = vxpose.xlu0.b32.cont [3/16] %v190, 128
        %271 = vxpose.xlu0.b32.cont [4/16] %v191, 128
        %272 = vxpose.xlu0.b32.cont [5/16] %v192, 128
        %273 = vxpose.xlu0.b32.cont [6/16] %v193, 128
        %274 = vxpose.xlu0.b32.cont [7/16] %v194, 128
        %275 = vxpose.xlu0.b32.cont [8/16] %v195, 128
        %276 = vxpose.xlu0.b32.cont [9/16] %v196, 128
        %277 = vxpose.xlu0.b32.cont [10/16] %v197, 128
        %278 = vxpose.xlu0.b32.cont [11/16] %v198, 128
        %279 = vxpose.xlu0.b32.cont [12/16] %v199, 128
        %280 = vxpose.xlu0.b32.cont [13/16] %v200, 128
        %281 = vxpose.xlu0.b32.cont [14/16] %v201, 128
        %282 = vxpose.xlu0.b32.cont [15/16] %v202, 128
        %283 = vxpose.xlu0.b32.end [16/16] %v203, 128
        %v284 = vpop.trf.xlu0
        %v285 = vpop.trf.xlu0
        %v286 = vpop.trf.xlu0
        %v287 = vpop.trf.xlu0
        %v288 = vpop.trf.xlu0
        %v289 = vpop.trf.xlu0
        %v290 = vpop.trf.xlu0
        %v291 = vpop.trf.xlu0
        %v292 = vpop.trf.xlu0
        %v293 = vpop.trf.xlu0
        %v294 = vpop.trf.xlu0
        %v295 = vpop.trf.xlu0
        %v296 = vpop.trf.xlu0
        %v297 = vpop.trf.xlu0
        %v298 = vpop.trf.xlu0
        %v299 = vpop.trf.xlu0
        %300 = vxpose.xlu0.b32.start [1/16] %v204, 128
        %301 = vxpose.xlu0.b32.cont [2/16] %v205, 128
        %302 = vxpose.xlu0.b32.cont [3/16] %v206, 128
        %303 = vxpose.xlu0.b32.cont [4/16] %v207, 128
        %304 = vxpose.xlu0.b32.cont [5/16] %v208, 128
        %305 = vxpose.xlu0.b32.cont [6/16] %v209, 128
        %306 = vxpose.xlu0.b32.cont [7/16] %v210, 128
        %307 = vxpose.xlu0.b32.cont [8/16] %v211, 128
        %308 = vxpose.xlu0.b32.cont [9/16] %v212, 128
        %309 = vxpose.xlu0.b32.cont [10/16] %v213, 128
        %310 = vxpose.xlu0.b32.cont [11/16] %v214, 128
        %311 = vxpose.xlu0.b32.cont [12/16] %v215, 128
        %312 = vxpose.xlu0.b32.cont [13/16] %v216, 128
        %313 = vxpose.xlu0.b32.cont [14/16] %v217, 128
        %314 = vxpose.xlu0.b32.cont [15/16] %v218, 128
        %315 = vxpose.xlu0.b32.end [16/16] %v219, 128
        %v316 = vpop.trf.xlu0
        %v317 = vpop.trf.xlu0
        %v318 = vpop.trf.xlu0
        %v319 = vpop.trf.xlu0
        %v320 = vpop.trf.xlu0
        %v321 = vpop.trf.xlu0
        %v322 = vpop.trf.xlu0
        %v323 = vpop.trf.xlu0
        %v324 = vpop.trf.xlu0
        %v325 = vpop.trf.xlu0
        %v326 = vpop.trf.xlu0
        %v327 = vpop.trf.xlu0
        %v328 = vpop.trf.xlu0
        %v329 = vpop.trf.xlu0
        %v330 = vpop.trf.xlu0
        %v331 = vpop.trf.xlu0
        %332 = vxpose.xlu0.b32.start [1/16] %v220, 128
        %333 = vxpose.xlu0.b32.cont [2/16] %v221, 128
        %334 = vxpose.xlu0.b32.cont [3/16] %v222, 128
        %335 = vxpose.xlu0.b32.cont [4/16] %v223, 128
        %336 = vxpose.xlu0.b32.cont [5/16] %v224, 128
        %337 = vxpose.xlu0.b32.cont [6/16] %v225, 128
        %338 = vxpose.xlu0.b32.cont [7/16] %v226, 128
        %339 = vxpose.xlu0.b32.cont [8/16] %v227, 128
        %340 = vxpose.xlu0.b32.cont [9/16] %v228, 128
        %341 = vxpose.xlu0.b32.cont [10/16] %v229, 128
        %342 = vxpose.xlu0.b32.cont [11/16] %v230, 128
        %343 = vxpose.xlu0.b32.cont [12/16] %v231, 128
        %344 = vxpose.xlu0.b32.cont [13/16] %v232, 128
        %345 = vxpose.xlu0.b32.cont [14/16] %v233, 128
        %346 = vxpose.xlu0.b32.cont [15/16] %v234, 128
        %347 = vxpose.xlu0.b32.end [16/16] %v235, 128
        %v348 = vpop.trf.xlu0
        %v349 = vpop.trf.xlu0
        %v350 = vpop.trf.xlu0
        %v351 = vpop.trf.xlu0
        %v352 = vpop.trf.xlu0
        %v353 = vpop.trf.xlu0
        %v354 = vpop.trf.xlu0
        %v355 = vpop.trf.xlu0
        %v356 = vpop.trf.xlu0
        %v357 = vpop.trf.xlu0
        %v358 = vpop.trf.xlu0
        %v359 = vpop.trf.xlu0
        %v360 = vpop.trf.xlu0
        %v361 = vpop.trf.xlu0
        %v362 = vpop.trf.xlu0
        %v363 = vpop.trf.xlu0
        %vm364 = vcmask 1043456
        %v365 = vsel %vm364, %v252, 0.0
        %v366 = vsel %vm364, %v284, 0.0
        %v367 = vsel %vm364, %v316, 0.0
        %v368 = vsel %vm364, %v348, 0.0
        %v369 = vmul.f32 %v365, 100.0
        %v370 = vmul.f32 %v366, 100.0
        %v371 = vmul.f32 %v367, 100.0
        %v372 = vmul.f32 %v368, 100.0
        %v373 = vmin.f32 %v369, 20.0
        %v374 = vmin.f32 %v370, 20.0
        %v375 = vmin.f32 %v371, 20.0
        %v376 = vmin.f32 %v372, 20.0
        %vm377 = vcmp.gt.f32.partialorder %v369, 20.0
        %vm378 = vcmp.gt.f32.partialorder %v370, 20.0
        %vm379 = vcmp.gt.f32.partialorder %v371, 20.0
        %vm380 = vcmp.gt.f32.partialorder %v372, 20.0
        %v381 = vmul.f32 %v373, 1.442695
        %v382 = vpow.pop %v381
        %v383 = vmul.f32 %v374, 1.442695
        %v384 = vpow.pop %v383
        %v385 = vmul.f32 %v375, 1.442695
        %v386 = vpow.pop %v385
        %v387 = vmul.f32 %v376, 1.442695
        %v388 = vpow.pop %v387
        %v389 = vadd.f32 %v382, 1.0
        %v390 = vlog2.pop %v389
        %v391 = vmul.f32 %v390, 0.6931472
        %v392 = vmul.f32 -0.5, %v382
        %v393 = vadd.f32 %v392, 1.0
        %v394 = vmul.f32 %v393, %v382
        %v395 = vand.u32 2147483647, %v382
        %vm396 = vcmp.lt.f32.partialorder %v395, 0.0004427343
        %v397 = vsel %vm396, %v394, %v391
        %v398 = vadd.f32 %v384, 1.0
        %v399 = vlog2.pop %v398
        %v400 = vmul.f32 %v399, 0.6931472
        %v401 = vmul.f32 -0.5, %v384
        %v402 = vadd.f32 %v401, 1.0
        %v403 = vmul.f32 %v402, %v384
        %v404 = vand.u32 2147483647, %v384
        %vm405 = vcmp.lt.f32.partialorder %v404, 0.0004427343
        %v406 = vsel %vm405, %v403, %v400
        %v407 = vadd.f32 %v386, 1.0
        %v408 = vlog2.pop %v407
        %v409 = vmul.f32 %v408, 0.6931472
        %v410 = vmul.f32 -0.5, %v386
        %v411 = vadd.f32 %v410, 1.0
        %v412 = vmul.f32 %v411, %v386
        %v413 = vand.u32 2147483647, %v386
        %vm414 = vcmp.lt.f32.partialorder %v413, 0.0004427343
        %v415 = vsel %vm414, %v412, %v409
        %v416 = vadd.f32 %v388, 1.0
        %v417 = vlog2.pop %v416
        %v418 = vmul.f32 %v417, 0.6931472
        %v419 = vmul.f32 -0.5, %v388
        %v420 = vadd.f32 %v419, 1.0
        %v421 = vmul.f32 %v420, %v388
        %v422 = vand.u32 2147483647, %v388
        %vm423 = vcmp.lt.f32.partialorder %v422, 0.0004427343
        %v424 = vsel %vm423, %v421, %v418
        %v425 = vmul.f32 %v397, 0.01
        %v426 = vmul.f32 %v406, 0.01
        %v427 = vmul.f32 %v415, 0.01
        %v428 = vmul.f32 %v424, 0.01
        %v429 = vsel %vm377, %v365, %v425
        %v430 = vsel %vm378, %v366, %v426
        %v431 = vsel %vm379, %v367, %v427
        %v432 = vsel %vm380, %v368, %v428
        %433 = vst [vmem:[#allocation2] sm:$0xff] %v429
        %434 = vst [vmem:[#allocation2 + $0x8] sm:$0xff] %v430
        %435 = vst [vmem:[#allocation2 + $0x10] sm:$0xff] %v431
        %436 = vst [vmem:[#allocation2 + $0x18] sm:$0xff] %v432
        %v437 = vld [vmem:[%s1] sm:$0xff]
        %v438 = vld [vmem:[%s1 + $0x20] sm:$0xff]
        %v439 = vld [vmem:[%s1 + $0x40] sm:$0xff]
        %v440 = vld [vmem:[%s1 + $0x60] sm:$0xff]
        %v441 = vld [vmem:[%s2] sm:$0xff]
        %v442 = vld [vmem:[%s2 + $0x8] sm:$0xff]
        %v443 = vld [vmem:[%s2 + $0x10] sm:$0xff]
        %v444 = vld [vmem:[%s2 + $0x18] sm:$0xff]
        %446 = vset.pattern.permute.xlu0 0
        %447 = vperm.xlu0 %446, %v441
        %v448 = vpop.permute.xlu0 %447
        %451 = vset.pattern.permute.xlu0 0
        %452 = vperm.xlu0 %451, %v442
        %v453 = vpop.permute.xlu0 %452
        %456 = vset.pattern.permute.xlu0 0
        %457 = vperm.xlu0 %456, %v443
        %v458 = vpop.permute.xlu0 %457
        %461 = vset.pattern.permute.xlu0 0
        %462 = vperm.xlu0 %461, %v444
        %v463 = vpop.permute.xlu0 %462
        %vm465 = vcmask 64512
        %v467 = vsel %vm465, %v437, 0
        %v470 = vsel %vm465, %v438, 0
        %v473 = vsel %vm465, %v439, 0
        %v476 = vsel %vm465, %v440, 0
        %478 = vmatprep.subr.mxu0 0.0
        %479 = vmatpush1.msra.mxu0 0.0
        %480 = vmatprep.subr.mxu0 0.0
        %481 = vmatpush1.msra.mxu0 0.0
        %482 = vmatprep.subr.mxu0 0.0
        %483 = vmatpush1.msra.mxu0 0.0
        %484 = vmatprep.subr.mxu0 0.0
        %485 = vmatpush1.msra.mxu0 0.0
        %486 = vmatprep.subr.mxu0 0.0
        %487 = vmatpush1.msra.mxu0 0.0
        %488 = vmatprep.subr.mxu0 0.0
        %489 = vmatpush1.msra.mxu0 0.0
        %490 = vmatprep.subr.mxu0 0.0
        %491 = vmatpush1.msra.mxu0 0.0
        %492 = vmatprep.subr.mxu0 0.0
        %493 = vmatpush1.msra.mxu0 0.0
        %494 = vmatprep.subr.mxu0 0.0
        %495 = vmatpush1.msra.mxu0 0.0
        %496 = vmatprep.subr.mxu0 0.0
        %497 = vmatpush1.msra.mxu0 0.0
        %498 = vmatprep.subr.mxu0 0.0
        %499 = vmatpush1.msra.mxu0 0.0
        %500 = vmatprep.subr.mxu0 0.0
        %501 = vmatpush1.msra.mxu0 0.0
        %502 = vmatprep.subr.mxu0 0.0
        %503 = vmatpush1.msra.mxu0 0.0
        %504 = vmatprep.subr.mxu0 0.0
        %505 = vmatpush1.msra.mxu0 0.0
        %506 = vmatprep.subr.mxu0 0.0
        %507 = vmatpush1.msra.mxu0 0.0
        %508 = vmatprep.subr.mxu0 %v366
        %509 = vmatpush1.msra.mxu0 %v365
        %510 = vmatprep.subr.mxu0 0.0
        %511 = vmatpush2.msra.mxu0 0.0
        %512 = vmatprep.subr.mxu0 0.0
        %513 = vmatpush2.msra.mxu0 0.0
        %514 = vmatprep.subr.mxu0 0.0
        %515 = vmatpush2.msra.mxu0 0.0
        %516 = vmatprep.subr.mxu0 0.0
        %517 = vmatpush2.msra.mxu0 0.0
        %518 = vmatprep.subr.mxu0 0.0
        %519 = vmatpush2.msra.mxu0 0.0
        %520 = vmatprep.subr.mxu0 0.0
        %521 = vmatpush2.msra.mxu0 0.0
        %522 = vmatprep.subr.mxu0 0.0
        %523 = vmatpush2.msra.mxu0 0.0
        %524 = vmatprep.subr.mxu0 0.0
        %525 = vmatpush2.msra.mxu0 0.0
        %526 = vmatprep.subr.mxu0 0.0
        %527 = vmatpush2.msra.mxu0 0.0
        %528 = vmatprep.subr.mxu0 0.0
        %529 = vmatpush2.msra.mxu0 0.0
        %530 = vmatprep.subr.mxu0 0.0
        %531 = vmatpush2.msra.mxu0 0.0
        %532 = vmatprep.subr.mxu0 0.0
        %533 = vmatpush2.msra.mxu0 0.0
        %534 = vmatprep.subr.mxu0 0.0
        %535 = vmatpush2.msra.mxu0 0.0
        %536 = vmatprep.subr.mxu0 0.0
        %537 = vmatpush2.msra.mxu0 0.0
        %538 = vmatprep.subr.mxu0 0.0
        %539 = vmatpush2.msra.mxu0 0.0
        %540 = vmatprep.subr.mxu0 0.0
        %541 = vmatpush2.msra.mxu0 0.0
        %542 = vmatprep.mubr.f32.mxu0 0.0
        %543 = vmatmul.mubr.f32.gmra.mxu0 %v467
        %v544 = vpop.f32.mrf.mxu0
        %v545 = vadd.f32 %v448, %v544
        %v546 = vpop.f32.mrf.mxu0
        %v547 = vadd.f32 %v448, %v546
        %548 = vmatprep.mubr.f32.mxu0 0.0
        %549 = vmatmul.mubr.f32.gmra.mxu0 %v470
        %v550 = vpop.f32.mrf.mxu0
        %v551 = vadd.f32 %v453, %v550
        %v552 = vpop.f32.mrf.mxu0
        %v553 = vadd.f32 %v453, %v552
        %554 = vmatprep.mubr.f32.mxu0 0.0
        %555 = vmatmul.mubr.f32.gmra.mxu0 %v473
        %v556 = vpop.f32.mrf.mxu0
        %v557 = vadd.f32 %v458, %v556
        %v558 = vpop.f32.mrf.mxu0
        %v559 = vadd.f32 %v458, %v558
        %560 = vmatprep.mubr.f32.mxu0 0.0
        %561 = vmatmul.mubr.f32.gmra.mxu0 %v476
        %v562 = vpop.f32.mrf.mxu0
        %v563 = vadd.f32 %v463, %v562
        %v564 = vpop.f32.mrf.mxu0
        %v565 = vadd.f32 %v463, %v564
        %566 = vdwg.mxu0
        %567 = vmatprep.subr.mxu0 0.0
        %568 = vmatpush1.msra.mxu0 0.0
        %569 = vmatprep.subr.mxu0 0.0
        %570 = vmatpush1.msra.mxu0 0.0
        %571 = vmatprep.subr.mxu0 0.0
        %572 = vmatpush1.msra.mxu0 0.0
        %573 = vmatprep.subr.mxu0 0.0
        %574 = vmatpush1.msra.mxu0 0.0
        %575 = vmatprep.subr.mxu0 0.0
        %576 = vmatpush1.msra.mxu0 0.0
        %577 = vmatprep.subr.mxu0 0.0
        %578 = vmatpush1.msra.mxu0 0.0
        %579 = vmatprep.subr.mxu0 0.0
        %580 = vmatpush1.msra.mxu0 0.0
        %581 = vmatprep.subr.mxu0 0.0
        %582 = vmatpush1.msra.mxu0 0.0
        %583 = vmatprep.subr.mxu0 0.0
        %584 = vmatpush1.msra.mxu0 0.0
        %585 = vmatprep.subr.mxu0 0.0
        %586 = vmatpush1.msra.mxu0 0.0
        %587 = vmatprep.subr.mxu0 0.0
        %588 = vmatpush1.msra.mxu0 0.0
        %589 = vmatprep.subr.mxu0 0.0
        %590 = vmatpush1.msra.mxu0 0.0
        %591 = vmatprep.subr.mxu0 0.0
        %592 = vmatpush1.msra.mxu0 0.0
        %593 = vmatprep.subr.mxu0 0.0
        %594 = vmatpush1.msra.mxu0 0.0
        %595 = vmatprep.subr.mxu0 0.0
        %596 = vmatpush1.msra.mxu0 0.0
        %597 = vmatprep.subr.mxu0 %v368
        %598 = vmatpush1.msra.mxu0 %v367
        %599 = vmatprep.subr.mxu0 0.0
        %600 = vmatpush2.msra.mxu0 0.0
        %601 = vmatprep.subr.mxu0 0.0
        %602 = vmatpush2.msra.mxu0 0.0
        %603 = vmatprep.subr.mxu0 0.0
        %604 = vmatpush2.msra.mxu0 0.0
        %605 = vmatprep.subr.mxu0 0.0
        %606 = vmatpush2.msra.mxu0 0.0
        %607 = vmatprep.subr.mxu0 0.0
        %608 = vmatpush2.msra.mxu0 0.0
        %609 = vmatprep.subr.mxu0 0.0
        %610 = vmatpush2.msra.mxu0 0.0
        %611 = vmatprep.subr.mxu0 0.0
        %612 = vmatpush2.msra.mxu0 0.0
        %613 = vmatprep.subr.mxu0 0.0
        %614 = vmatpush2.msra.mxu0 0.0
        %615 = vmatprep.subr.mxu0 0.0
        %616 = vmatpush2.msra.mxu0 0.0
        %617 = vmatprep.subr.mxu0 0.0
        %618 = vmatpush2.msra.mxu0 0.0
        %619 = vmatprep.subr.mxu0 0.0
        %620 = vmatpush2.msra.mxu0 0.0
        %621 = vmatprep.subr.mxu0 0.0
        %622 = vmatpush2.msra.mxu0 0.0
        %623 = vmatprep.subr.mxu0 0.0
        %624 = vmatpush2.msra.mxu0 0.0
        %625 = vmatprep.subr.mxu0 0.0
        %626 = vmatpush2.msra.mxu0 0.0
        %627 = vmatprep.subr.mxu0 0.0
        %628 = vmatpush2.msra.mxu0 0.0
        %629 = vmatprep.subr.mxu0 0.0
        %630 = vmatpush2.msra.mxu0 0.0
        %631 = vmatprep.mubr.f32.mxu0 0.0
        %632 = vmatmul.mubr.f32.gmra.mxu0 %v467
        %v633 = vpop.f32.mrf.mxu0
        %v634 = vadd.f32 %v448, %v633
        %v635 = vpop.f32.mrf.mxu0
        %v636 = vadd.f32 %v448, %v635
        %637 = vmatprep.mubr.f32.mxu0 0.0
        %638 = vmatmul.mubr.f32.gmra.mxu0 %v470
        %v639 = vpop.f32.mrf.mxu0
        %v640 = vadd.f32 %v453, %v639
        %v641 = vpop.f32.mrf.mxu0
        %v642 = vadd.f32 %v453, %v641
        %643 = vmatprep.mubr.f32.mxu0 0.0
        %644 = vmatmul.mubr.f32.gmra.mxu0 %v473
        %v645 = vpop.f32.mrf.mxu0
        %v646 = vadd.f32 %v458, %v645
        %v647 = vpop.f32.mrf.mxu0
        %v648 = vadd.f32 %v458, %v647
        %649 = vmatprep.mubr.f32.mxu0 0.0
        %650 = vmatmul.mubr.f32.gmra.mxu0 %v476
        %v651 = vpop.f32.mrf.mxu0
        %v652 = vadd.f32 %v463, %v651
        %v653 = vpop.f32.mrf.mxu0
        %v654 = vadd.f32 %v463, %v653
        %655 = vdwg.mxu0
        %v656 = vmul.f32 %v545, 100.0
        %v657 = vmul.f32 %v547, 100.0
        %v658 = vmul.f32 %v634, 100.0
        %v659 = vmul.f32 %v636, 100.0
        %v660 = vmul.f32 %v551, 100.0
        %v661 = vmul.f32 %v553, 100.0
        %v662 = vmul.f32 %v640, 100.0
        %v663 = vmul.f32 %v642, 100.0
        %v664 = vmul.f32 %v557, 100.0
        %v665 = vmul.f32 %v559, 100.0
        %v666 = vmul.f32 %v646, 100.0
        %v667 = vmul.f32 %v648, 100.0
        %v668 = vmul.f32 %v563, 100.0
        %v669 = vmul.f32 %v565, 100.0
        %v670 = vmul.f32 %v652, 100.0
        %v671 = vmul.f32 %v654, 100.0
        %v672 = vmin.f32 %v656, 20.0
        %v673 = vmin.f32 %v657, 20.0
        %v674 = vmin.f32 %v658, 20.0
        %v675 = vmin.f32 %v659, 20.0
        %v676 = vmin.f32 %v660, 20.0
        %v677 = vmin.f32 %v661, 20.0
        %v678 = vmin.f32 %v662, 20.0
        %v679 = vmin.f32 %v663, 20.0
        %v680 = vmin.f32 %v664, 20.0
        %v681 = vmin.f32 %v665, 20.0
        %v682 = vmin.f32 %v666, 20.0
        %v683 = vmin.f32 %v667, 20.0
        %v684 = vmin.f32 %v668, 20.0
        %v685 = vmin.f32 %v669, 20.0
        %v686 = vmin.f32 %v670, 20.0
        %v687 = vmin.f32 %v671, 20.0
        %vm688 = vcmp.gt.f32.partialorder %v656, 20.0
        %vm689 = vcmp.gt.f32.partialorder %v657, 20.0
        %vm690 = vcmp.gt.f32.partialorder %v658, 20.0
        %vm691 = vcmp.gt.f32.partialorder %v659, 20.0
        %vm692 = vcmp.gt.f32.partialorder %v660, 20.0
        %vm693 = vcmp.gt.f32.partialorder %v661, 20.0
        %vm694 = vcmp.gt.f32.partialorder %v662, 20.0
        %vm695 = vcmp.gt.f32.partialorder %v663, 20.0
        %vm696 = vcmp.gt.f32.partialorder %v664, 20.0
        %vm697 = vcmp.gt.f32.partialorder %v665, 20.0
        %vm698 = vcmp.gt.f32.partialorder %v666, 20.0
        %vm699 = vcmp.gt.f32.partialorder %v667, 20.0
        %vm700 = vcmp.gt.f32.partialorder %v668, 20.0
        %vm701 = vcmp.gt.f32.partialorder %v669, 20.0
        %vm702 = vcmp.gt.f32.partialorder %v670, 20.0
        %vm703 = vcmp.gt.f32.partialorder %v671, 20.0
        %v704 = vmul.f32 %v672, 1.442695
        %v705 = vpow.pop %v704
        %v706 = vmul.f32 %v673, 1.442695
        %v707 = vpow.pop %v706
        %v708 = vmul.f32 %v674, 1.442695
        %v709 = vpow.pop %v708
        %v710 = vmul.f32 %v675, 1.442695
        %v711 = vpow.pop %v710
        %v712 = vmul.f32 %v676, 1.442695
        %v713 = vpow.pop %v712
        %v714 = vmul.f32 %v677, 1.442695
        %v715 = vpow.pop %v714
        %v716 = vmul.f32 %v678, 1.442695
        %v717 = vpow.pop %v716
        %v718 = vmul.f32 %v679, 1.442695
        %v719 = vpow.pop %v718
        %v720 = vmul.f32 %v680, 1.442695
        %v721 = vpow.pop %v720
        %v722 = vmul.f32 %v681, 1.442695
        %v723 = vpow.pop %v722
        %v724 = vmul.f32 %v682, 1.442695
        %v725 = vpow.pop %v724
        %v726 = vmul.f32 %v683, 1.442695
        %v727 = vpow.pop %v726
        %v728 = vmul.f32 %v684, 1.442695
        %v729 = vpow.pop %v728
        %v730 = vmul.f32 %v685, 1.442695
        %v731 = vpow.pop %v730
        %v732 = vmul.f32 %v686, 1.442695
        %v733 = vpow.pop %v732
        %v734 = vmul.f32 %v687, 1.442695
        %v735 = vpow.pop %v734
        %v736 = vadd.f32 %v705, 1.0
        %v737 = vlog2.pop %v736
        %v738 = vmul.f32 %v737, 0.6931472
        %v739 = vmul.f32 -0.5, %v705
        %v740 = vadd.f32 %v739, 1.0
        %v741 = vmul.f32 %v740, %v705
        %v742 = vand.u32 2147483647, %v705
        %vm743 = vcmp.lt.f32.partialorder %v742, 0.0004427343
        %v744 = vsel %vm743, %v741, %v738
        %v745 = vadd.f32 %v707, 1.0
        %v746 = vlog2.pop %v745
        %v747 = vmul.f32 %v746, 0.6931472
        %v748 = vmul.f32 -0.5, %v707
        %v749 = vadd.f32 %v748, 1.0
        %v750 = vmul.f32 %v749, %v707
        %v751 = vand.u32 2147483647, %v707
        %vm752 = vcmp.lt.f32.partialorder %v751, 0.0004427343
        %v753 = vsel %vm752, %v750, %v747
        %v754 = vadd.f32 %v709, 1.0
        %v755 = vlog2.pop %v754
        %v756 = vmul.f32 %v755, 0.6931472
        %v757 = vmul.f32 -0.5, %v709
        %v758 = vadd.f32 %v757, 1.0
        %v759 = vmul.f32 %v758, %v709
        %v760 = vand.u32 2147483647, %v709
        %vm761 = vcmp.lt.f32.partialorder %v760, 0.0004427343
        %v762 = vsel %vm761, %v759, %v756
        %v763 = vadd.f32 %v711, 1.0
        %v764 = vlog2.pop %v763
        %v765 = vmul.f32 %v764, 0.6931472
        %v766 = vmul.f32 -0.5, %v711
        %v767 = vadd.f32 %v766, 1.0
        %v768 = vmul.f32 %v767, %v711
        %v769 = vand.u32 2147483647, %v711
        %vm770 = vcmp.lt.f32.partialorder %v769, 0.0004427343
        %v771 = vsel %vm770, %v768, %v765
        %v772 = vadd.f32 %v713, 1.0
        %v773 = vlog2.pop %v772
        %v774 = vmul.f32 %v773, 0.6931472
        %v775 = vmul.f32 -0.5, %v713
        %v776 = vadd.f32 %v775, 1.0
        %v777 = vmul.f32 %v776, %v713
        %v778 = vand.u32 2147483647, %v713
        %vm779 = vcmp.lt.f32.partialorder %v778, 0.0004427343
        %v780 = vsel %vm779, %v777, %v774
        %v781 = vadd.f32 %v715, 1.0
        %v782 = vlog2.pop %v781
        %v783 = vmul.f32 %v782, 0.6931472
        %v784 = vmul.f32 -0.5, %v715
        %v785 = vadd.f32 %v784, 1.0
        %v786 = vmul.f32 %v785, %v715
        %v787 = vand.u32 2147483647, %v715
        %vm788 = vcmp.lt.f32.partialorder %v787, 0.0004427343
        %v789 = vsel %vm788, %v786, %v783
        %v790 = vadd.f32 %v717, 1.0
        %v791 = vlog2.pop %v790
        %v792 = vmul.f32 %v791, 0.6931472
        %v793 = vmul.f32 -0.5, %v717
        %v794 = vadd.f32 %v793, 1.0
        %v795 = vmul.f32 %v794, %v717
        %v796 = vand.u32 2147483647, %v717
        %vm797 = vcmp.lt.f32.partialorder %v796, 0.0004427343
        %v798 = vsel %vm797, %v795, %v792
        %v799 = vadd.f32 %v719, 1.0
        %v800 = vlog2.pop %v799
        %v801 = vmul.f32 %v800, 0.6931472
        %v802 = vmul.f32 -0.5, %v719
        %v803 = vadd.f32 %v802, 1.0
        %v804 = vmul.f32 %v803, %v719
        %v805 = vand.u32 2147483647, %v719
        %vm806 = vcmp.lt.f32.partialorder %v805, 0.0004427343
        %v807 = vsel %vm806, %v804, %v801
        %v808 = vadd.f32 %v721, 1.0
        %v809 = vlog2.pop %v808
        %v810 = vmul.f32 %v809, 0.6931472
        %v811 = vmul.f32 -0.5, %v721
        %v812 = vadd.f32 %v811, 1.0
        %v813 = vmul.f32 %v812, %v721
        %v814 = vand.u32 2147483647, %v721
        %vm815 = vcmp.lt.f32.partialorder %v814, 0.0004427343
        %v816 = vsel %vm815, %v813, %v810
        %v817 = vadd.f32 %v723, 1.0
        %v818 = vlog2.pop %v817
        %v819 = vmul.f32 %v818, 0.6931472
        %v820 = vmul.f32 -0.5, %v723
        %v821 = vadd.f32 %v820, 1.0
        %v822 = vmul.f32 %v821, %v723
        %v823 = vand.u32 2147483647, %v723
        %vm824 = vcmp.lt.f32.partialorder %v823, 0.0004427343
        %v825 = vsel %vm824, %v822, %v819
        %v826 = vadd.f32 %v725, 1.0
        %v827 = vlog2.pop %v826
        %v828 = vmul.f32 %v827, 0.6931472
        %v829 = vmul.f32 -0.5, %v725
        %v830 = vadd.f32 %v829, 1.0
        %v831 = vmul.f32 %v830, %v725
        %v832 = vand.u32 2147483647, %v725
        %vm833 = vcmp.lt.f32.partialorder %v832, 0.0004427343
        %v834 = vsel %vm833, %v831, %v828
        %v835 = vadd.f32 %v727, 1.0
        %v836 = vlog2.pop %v835
        %v837 = vmul.f32 %v836, 0.6931472
        %v838 = vmul.f32 -0.5, %v727
        %v839 = vadd.f32 %v838, 1.0
        %v840 = vmul.f32 %v839, %v727
        %v841 = vand.u32 2147483647, %v727
        %vm842 = vcmp.lt.f32.partialorder %v841, 0.0004427343
        %v843 = vsel %vm842, %v840, %v837
        %v844 = vadd.f32 %v729, 1.0
        %v845 = vlog2.pop %v844
        %v846 = vmul.f32 %v845, 0.6931472
        %v847 = vmul.f32 -0.5, %v729
        %v848 = vadd.f32 %v847, 1.0
        %v849 = vmul.f32 %v848, %v729
        %v850 = vand.u32 2147483647, %v729
        %vm851 = vcmp.lt.f32.partialorder %v850, 0.0004427343
        %v852 = vsel %vm851, %v849, %v846
        %v853 = vadd.f32 %v731, 1.0
        %v854 = vlog2.pop %v853
        %v855 = vmul.f32 %v854, 0.6931472
        %v856 = vmul.f32 -0.5, %v731
        %v857 = vadd.f32 %v856, 1.0
        %v858 = vmul.f32 %v857, %v731
        %v859 = vand.u32 2147483647, %v731
        %vm860 = vcmp.lt.f32.partialorder %v859, 0.0004427343
        %v861 = vsel %vm860, %v858, %v855
        %v862 = vadd.f32 %v733, 1.0
        %v863 = vlog2.pop %v862
        %v864 = vmul.f32 %v863, 0.6931472
        %v865 = vmul.f32 -0.5, %v733
        %v866 = vadd.f32 %v865, 1.0
        %v867 = vmul.f32 %v866, %v733
        %v868 = vand.u32 2147483647, %v733
        %vm869 = vcmp.lt.f32.partialorder %v868, 0.0004427343
        %v870 = vsel %vm869, %v867, %v864
        %v871 = vadd.f32 %v735, 1.0
        %v872 = vlog2.pop %v871
        %v873 = vmul.f32 %v872, 0.6931472
        %v874 = vmul.f32 -0.5, %v735
        %v875 = vadd.f32 %v874, 1.0
        %v876 = vmul.f32 %v875, %v735
        %v877 = vand.u32 2147483647, %v735
        %vm878 = vcmp.lt.f32.partialorder %v877, 0.0004427343
        %v879 = vsel %vm878, %v876, %v873
        %v880 = vmul.f32 %v744, 0.01
        %v881 = vmul.f32 %v753, 0.01
        %v882 = vmul.f32 %v762, 0.01
        %v883 = vmul.f32 %v771, 0.01
        %v884 = vmul.f32 %v780, 0.01
        %v885 = vmul.f32 %v789, 0.01
        %v886 = vmul.f32 %v798, 0.01
        %v887 = vmul.f32 %v807, 0.01
        %v888 = vmul.f32 %v816, 0.01
        %v889 = vmul.f32 %v825, 0.01
        %v890 = vmul.f32 %v834, 0.01
        %v891 = vmul.f32 %v843, 0.01
        %v892 = vmul.f32 %v852, 0.01
        %v893 = vmul.f32 %v861, 0.01
        %v894 = vmul.f32 %v870, 0.01
        %v895 = vmul.f32 %v879, 0.01
        %v896 = vsel %vm688, %v545, %v880
        %v897 = vsel %vm689, %v547, %v881
        %v898 = vsel %vm690, %v634, %v882
        %v899 = vsel %vm691, %v636, %v883
        %v900 = vsel %vm692, %v551, %v884
        %v901 = vsel %vm693, %v553, %v885
        %v902 = vsel %vm694, %v640, %v886
        %v903 = vsel %vm695, %v642, %v887
        %v904 = vsel %vm696, %v557, %v888
        %v905 = vsel %vm697, %v559, %v889
        %v906 = vsel %vm698, %v646, %v890
        %v907 = vsel %vm699, %v648, %v891
        %v908 = vsel %vm700, %v563, %v892
        %v909 = vsel %vm701, %v565, %v893
        %v910 = vsel %vm702, %v652, %v894
        %v911 = vsel %vm703, %v654, %v895
        %912 = vst [vmem:[#allocation2 + $0x20] sm:$0xff] %v896
        %913 = vst [vmem:[#allocation2 + $0x28] sm:$0xff] %v897
        %914 = vst [vmem:[#allocation2 + $0x30] sm:$0xff] %v898
        %915 = vst [vmem:[#allocation2 + $0x38] sm:$0xff] %v899
        %916 = vst [vmem:[#allocation2 + $0x40] sm:$0xff] %v900
        %917 = vst [vmem:[#allocation2 + $0x48] sm:$0xff] %v901
        %918 = vst [vmem:[#allocation2 + $0x50] sm:$0xff] %v902
        %919 = vst [vmem:[#allocation2 + $0x58] sm:$0xff] %v903
        %920 = vst [vmem:[#allocation2 + $0x60] sm:$0xff] %v904
        %921 = vst [vmem:[#allocation2 + $0x68] sm:$0xff] %v905
        %922 = vst [vmem:[#allocation2 + $0x70] sm:$0xff] %v906
        %923 = vst [vmem:[#allocation2 + $0x78] sm:$0xff] %v907
        %924 = vst [vmem:[#allocation2 + $0x80] sm:$0xff] %v908
        %925 = vst [vmem:[#allocation2 + $0x88] sm:$0xff] %v909
        %926 = vst [vmem:[#allocation2 + $0x90] sm:$0xff] %v910
        %927 = vst [vmem:[#allocation2 + $0x98] sm:$0xff] %v911
        %v928 = vld [vmem:[%s1 + $0x8] sm:$0xff]
        %v929 = vld [vmem:[%s1 + $0x28] sm:$0xff]
        %v930 = vld [vmem:[%s1 + $0x48] sm:$0xff]
        %v931 = vld [vmem:[%s1 + $0x68] sm:$0xff]
        %v932 = vld [vmem:[%s1 + $0x88] sm:$0xf]
        %v933 = vld [vmem:[%s2] sm:$0xff]
        %v934 = vld [vmem:[%s2 + $0x8] sm:$0xff]
        %v935 = vld [vmem:[%s2 + $0x10] sm:$0xff]
        %v936 = vld [vmem:[%s2 + $0x18] sm:$0xff]
        %v937 = vld [vmem:[%s2 + $0x20] sm:$0xf]
        %v938 = vld [vmem:[#allocation2] sm:$0xff]
        %v939 = vld [vmem:[#allocation2 + $0x8] sm:$0xff]
        %v940 = vld [vmem:[#allocation2 + $0x10] sm:$0xff]
        %v941 = vld [vmem:[#allocation2 + $0x18] sm:$0xff]
        %v942 = vld [vmem:[#allocation2 + $0x20] sm:$0xff]
        %v943 = vld [vmem:[#allocation2 + $0x28] sm:$0xff]
        %v944 = vld [vmem:[#allocation2 + $0x30] sm:$0xff]
        %v945 = vld [vmem:[#allocation2 + $0x38] sm:$0xff]
        %v946 = vld [vmem:[#allocation2 + $0x40] sm:$0xff]
        %v947 = vld [vmem:[#allocation2 + $0x48] sm:$0xff]
        %v948 = vld [vmem:[#allocation2 + $0x50] sm:$0xff]
        %v949 = vld [vmem:[#allocation2 + $0x58] sm:$0xff]
        %v950 = vld [vmem:[#allocation2 + $0x60] sm:$0xff]
        %v951 = vld [vmem:[#allocation2 + $0x68] sm:$0xff]
        %v952 = vld [vmem:[#allocation2 + $0x70] sm:$0xff]
        %v953 = vld [vmem:[#allocation2 + $0x78] sm:$0xff]
        %v954 = vld [vmem:[#allocation2 + $0x80] sm:$0xff]
        %v955 = vld [vmem:[#allocation2 + $0x88] sm:$0xff]
        %v956 = vld [vmem:[#allocation2 + $0x90] sm:$0xff]
        %v957 = vld [vmem:[#allocation2 + $0x98] sm:$0xff]
        %959 = vset.pattern.permute.xlu0 1
        %960 = vperm.xlu0 %959, %v933
        %v961 = vpop.permute.xlu0 %960
        %964 = vset.pattern.permute.xlu0 1
        %965 = vperm.xlu0 %964, %v934
        %v966 = vpop.permute.xlu0 %965
        %969 = vset.pattern.permute.xlu0 1
        %970 = vperm.xlu0 %969, %v935
        %v971 = vpop.permute.xlu0 %970
        %974 = vset.pattern.permute.xlu0 1
        %975 = vperm.xlu0 %974, %v936
        %v976 = vpop.permute.xlu0 %975
        %979 = vset.pattern.permute.xlu0 1
        %980 = vperm.xlu0 %979, %v937
        %v981 = vpop.permute.xlu0 %980
        %vm983 = vcmask 326656
        %v985 = vsel %vm983, %v928, 0
        %v988 = vsel %vm983, %v929, 0
        %v991 = vsel %vm983, %v930, 0
        %v994 = vsel %vm983, %v931, 0
        %v997 = vsel %vm983, %v932, 0
        %999 = vmatprep.subr.mxu0 0.0
        %1000 = vmatpush1.msra.mxu0 0.0
        %1001 = vmatprep.subr.mxu0 0.0
        %1002 = vmatpush1.msra.mxu0 0.0
        %1003 = vmatprep.subr.mxu0 0.0
        %1004 = vmatpush1.msra.mxu0 0.0
        %1005 = vmatprep.subr.mxu0 0.0
        %1006 = vmatpush1.msra.mxu0 0.0
        %1007 = vmatprep.subr.mxu0 0.0
        %1008 = vmatpush1.msra.mxu0 0.0
        %1009 = vmatprep.subr.mxu0 0.0
        %1010 = vmatpush1.msra.mxu0 0.0
        %1011 = vmatprep.subr.mxu0 0.0
        %1012 = vmatpush1.msra.mxu0 0.0
        %1013 = vmatprep.subr.mxu0 0.0
        %1014 = vmatpush1.msra.mxu0 0.0
        %1015 = vmatprep.subr.mxu0 0.0
        %1016 = vmatpush1.msra.mxu0 0.0
        %1017 = vmatprep.subr.mxu0 0.0
        %1018 = vmatpush1.msra.mxu0 0.0
        %1019 = vmatprep.subr.mxu0 0.0
        %1020 = vmatpush1.msra.mxu0 0.0
        %1021 = vmatprep.subr.mxu0 %v955
        %1022 = vmatpush1.msra.mxu0 %v954
        %1023 = vmatprep.subr.mxu0 %v951
        %1024 = vmatpush1.msra.mxu0 %v950
        %1025 = vmatprep.subr.mxu0 %v947
        %1026 = vmatpush1.msra.mxu0 %v946
        %1027 = vmatprep.subr.mxu0 %v943
        %1028 = vmatpush1.msra.mxu0 %v942
        %1029 = vmatprep.subr.mxu0 %v939
        %1030 = vmatpush1.msra.mxu0 %v938
        %1031 = vmatprep.subr.mxu0 0.0
        %1032 = vmatpush2.msra.mxu0 0.0
        %1033 = vmatprep.subr.mxu0 0.0
        %1034 = vmatpush2.msra.mxu0 0.0
        %1035 = vmatprep.subr.mxu0 0.0
        %1036 = vmatpush2.msra.mxu0 0.0
        %1037 = vmatprep.subr.mxu0 0.0
        %1038 = vmatpush2.msra.mxu0 0.0
        %1039 = vmatprep.subr.mxu0 0.0
        %1040 = vmatpush2.msra.mxu0 0.0
        %1041 = vmatprep.subr.mxu0 0.0
        %1042 = vmatpush2.msra.mxu0 0.0
        %1043 = vmatprep.subr.mxu0 0.0
        %1044 = vmatpush2.msra.mxu0 0.0
        %1045 = vmatprep.subr.mxu0 0.0
        %1046 = vmatpush2.msra.mxu0 0.0
        %1047 = vmatprep.subr.mxu0 0.0
        %1048 = vmatpush2.msra.mxu0 0.0
        %1049 = vmatprep.subr.mxu0 0.0
        %1050 = vmatpush2.msra.mxu0 0.0
        %1051 = vmatprep.subr.mxu0 0.0
        %1052 = vmatpush2.msra.mxu0 0.0
        %1053 = vmatprep.subr.mxu0 0.0
        %1054 = vmatpush2.msra.mxu0 0.0
        %1055 = vmatprep.subr.mxu0 0.0
        %1056 = vmatpush2.msra.mxu0 0.0
        %1057 = vmatprep.subr.mxu0 0.0
        %1058 = vmatpush2.msra.mxu0 0.0
        %1059 = vmatprep.subr.mxu0 0.0
        %1060 = vmatpush2.msra.mxu0 0.0
        %1061 = vmatprep.subr.mxu0 0.0
        %1062 = vmatpush2.msra.mxu0 0.0
        %1063 = vmatprep.mubr.f32.mxu0 0.0
        %1064 = vmatmul.mubr.f32.gmra.mxu0 %v985
        %v1065 = vpop.f32.mrf.mxu0
        %v1066 = vadd.f32 %v961, %v1065
        %v1067 = vpop.f32.mrf.mxu0
        %v1068 = vadd.f32 %v961, %v1067
        %1069 = vmatprep.mubr.f32.mxu0 0.0
        %1070 = vmatmul.mubr.f32.gmra.mxu0 %v988
        %v1071 = vpop.f32.mrf.mxu0
        %v1072 = vadd.f32 %v966, %v1071
        %v1073 = vpop.f32.mrf.mxu0
        %v1074 = vadd.f32 %v966, %v1073
        %1075 = vmatprep.mubr.f32.mxu0 0.0
        %1076 = vmatmul.mubr.f32.gmra.mxu0 %v991
        %v1077 = vpop.f32.mrf.mxu0
        %v1078 = vadd.f32 %v971, %v1077
        %v1079 = vpop.f32.mrf.mxu0
        %v1080 = vadd.f32 %v971, %v1079
        %1081 = vmatprep.mubr.f32.mxu0 0.0
        %1082 = vmatmul.mubr.f32.gmra.mxu0 %v994
        %v1083 = vpop.f32.mrf.mxu0
        %v1084 = vadd.f32 %v976, %v1083
        %v1085 = vpop.f32.mrf.mxu0
        %v1086 = vadd.f32 %v976, %v1085
        %1087 = vmatprep.mubr.f32.mxu0 0.0
        %1088 = vmatmul.mubr.f32.gmra.mxu0 %v997
        %v1089 = vpop.f32.mrf.mxu0
        %v1090 = vadd.f32 %v981, %v1089
        %v1091 = vpop.f32.mrf.mxu0
        %v1092 = vadd.f32 %v981, %v1091
        %1093 = vdwg.mxu0
        %1094 = vmatprep.subr.mxu0 0.0
        %1095 = vmatpush1.msra.mxu0 0.0
        %1096 = vmatprep.subr.mxu0 0.0
        %1097 = vmatpush1.msra.mxu0 0.0
        %1098 = vmatprep.subr.mxu0 0.0
        %1099 = vmatpush1.msra.mxu0 0.0
        %1100 = vmatprep.subr.mxu0 0.0
        %1101 = vmatpush1.msra.mxu0 0.0
        %1102 = vmatprep.subr.mxu0 0.0
        %1103 = vmatpush1.msra.mxu0 0.0
        %1104 = vmatprep.subr.mxu0 0.0
        %1105 = vmatpush1.msra.mxu0 0.0
        %1106 = vmatprep.subr.mxu0 0.0
        %1107 = vmatpush1.msra.mxu0 0.0
        %1108 = vmatprep.subr.mxu0 0.0
        %1109 = vmatpush1.msra.mxu0 0.0
        %1110 = vmatprep.subr.mxu0 0.0
        %1111 = vmatpush1.msra.mxu0 0.0
        %1112 = vmatprep.subr.mxu0 0.0
        %1113 = vmatpush1.msra.mxu0 0.0
        %1114 = vmatprep.subr.mxu0 0.0
        %1115 = vmatpush1.msra.mxu0 0.0
        %1116 = vmatprep.subr.mxu0 %v957
        %1117 = vmatpush1.msra.mxu0 %v956
        %1118 = vmatprep.subr.mxu0 %v953
        %1119 = vmatpush1.msra.mxu0 %v952
        %1120 = vmatprep.subr.mxu0 %v949
        %1121 = vmatpush1.msra.mxu0 %v948
        %1122 = vmatprep.subr.mxu0 %v945
        %1123 = vmatpush1.msra.mxu0 %v944
        %1124 = vmatprep.subr.mxu0 %v941
        %1125 = vmatpush1.msra.mxu0 %v940
        %1126 = vmatprep.subr.mxu0 0.0
        %1127 = vmatpush2.msra.mxu0 0.0
        %1128 = vmatprep.subr.mxu0 0.0
        %1129 = vmatpush2.msra.mxu0 0.0
        %1130 = vmatprep.subr.mxu0 0.0
        %1131 = vmatpush2.msra.mxu0 0.0
        %1132 = vmatprep.subr.mxu0 0.0
        %1133 = vmatpush2.msra.mxu0 0.0
        %1134 = vmatprep.subr.mxu0 0.0
        %1135 = vmatpush2.msra.mxu0 0.0
        %1136 = vmatprep.subr.mxu0 0.0
        %1137 = vmatpush2.msra.mxu0 0.0
        %1138 = vmatprep.subr.mxu0 0.0
        %1139 = vmatpush2.msra.mxu0 0.0
        %1140 = vmatprep.subr.mxu0 0.0
        %1141 = vmatpush2.msra.mxu0 0.0
        %1142 = vmatprep.subr.mxu0 0.0
        %1143 = vmatpush2.msra.mxu0 0.0
        %1144 = vmatprep.subr.mxu0 0.0
        %1145 = vmatpush2.msra.mxu0 0.0
        %1146 = vmatprep.subr.mxu0 0.0
        %1147 = vmatpush2.msra.mxu0 0.0
        %1148 = vmatprep.subr.mxu0 0.0
        %1149 = vmatpush2.msra.mxu0 0.0
        %1150 = vmatprep.subr.mxu0 0.0
        %1151 = vmatpush2.msra.mxu0 0.0
        %1152 = vmatprep.subr.mxu0 0.0
        %1153 = vmatpush2.msra.mxu0 0.0
        %1154 = vmatprep.subr.mxu0 0.0
        %1155 = vmatpush2.msra.mxu0 0.0
        %1156 = vmatprep.subr.mxu0 0.0
        %1157 = vmatpush2.msra.mxu0 0.0
        %1158 = vmatprep.mubr.f32.mxu0 0.0
        %1159 = vmatmul.mubr.f32.gmra.mxu0 %v985
        %v1160 = vpop.f32.mrf.mxu0
        %v1161 = vadd.f32 %v961, %v1160
        %v1162 = vpop.f32.mrf.mxu0
        %v1163 = vadd.f32 %v961, %v1162
        %1164 = vmatprep.mubr.f32.mxu0 0.0
        %1165 = vmatmul.mubr.f32.gmra.mxu0 %v988
        %v1166 = vpop.f32.mrf.mxu0
        %v1167 = vadd.f32 %v966, %v1166
        %v1168 = vpop.f32.mrf.mxu0
        %v1169 = vadd.f32 %v966, %v1168
        %1170 = vmatprep.mubr.f32.mxu0 0.0
        %1171 = vmatmul.mubr.f32.gmra.mxu0 %v991
        %v1172 = vpop.f32.mrf.mxu0
        %v1173 = vadd.f32 %v971, %v1172
        %v1174 = vpop.f32.mrf.mxu0
        %v1175 = vadd.f32 %v971, %v1174
        %1176 = vmatprep.mubr.f32.mxu0 0.0
        %1177 = vmatmul.mubr.f32.gmra.mxu0 %v994
        %v1178 = vpop.f32.mrf.mxu0
        %v1179 = vadd.f32 %v976, %v1178
        %v1180 = vpop.f32.mrf.mxu0
        %v1181 = vadd.f32 %v976, %v1180
        %1182 = vmatprep.mubr.f32.mxu0 0.0
        %1183 = vmatmul.mubr.f32.gmra.mxu0 %v997
        %v1184 = vpop.f32.mrf.mxu0
        %v1185 = vadd.f32 %v981, %v1184
        %v1186 = vpop.f32.mrf.mxu0
        %v1187 = vadd.f32 %v981, %v1186
        %1188 = vdwg.mxu0
        %v1189 = vmul.f32 %v1066, 100.0
        %v1190 = vmul.f32 %v1068, 100.0
        %v1191 = vmul.f32 %v1161, 100.0
        %v1192 = vmul.f32 %v1163, 100.0
        %v1193 = vmul.f32 %v1072, 100.0
        %v1194 = vmul.f32 %v1074, 100.0
        %v1195 = vmul.f32 %v1167, 100.0
        %v1196 = vmul.f32 %v1169, 100.0
        %v1197 = vmul.f32 %v1078, 100.0
        %v1198 = vmul.f32 %v1080, 100.0
        %v1199 = vmul.f32 %v1173, 100.0
        %v1200 = vmul.f32 %v1175, 100.0
        %v1201 = vmul.f32 %v1084, 100.0
        %v1202 = vmul.f32 %v1086, 100.0
        %v1203 = vmul.f32 %v1179, 100.0
        %v1204 = vmul.f32 %v1181, 100.0
        %v1205 = vmul.f32 %v1090, 100.0
        %v1206 = vmul.f32 %v1092, 100.0
        %v1207 = vmul.f32 %v1185, 100.0
        %v1208 = vmul.f32 %v1187, 100.0
        %v1209 = vmin.f32 %v1189, 20.0
        %v1210 = vmin.f32 %v1190, 20.0
        %v1211 = vmin.f32 %v1191, 20.0
        %v1212 = vmin.f32 %v1192, 20.0
        %v1213 = vmin.f32 %v1193, 20.0
        %v1214 = vmin.f32 %v1194, 20.0
        %v1215 = vmin.f32 %v1195, 20.0
        %v1216 = vmin.f32 %v1196, 20.0
        %v1217 = vmin.f32 %v1197, 20.0
        %v1218 = vmin.f32 %v1198, 20.0
        %v1219 = vmin.f32 %v1199, 20.0
        %v1220 = vmin.f32 %v1200, 20.0
        %v1221 = vmin.f32 %v1201, 20.0
        %v1222 = vmin.f32 %v1202, 20.0
        %v1223 = vmin.f32 %v1203, 20.0
        %v1224 = vmin.f32 %v1204, 20.0
        %v1225 = vmin.f32 %v1205, 20.0
        %v1226 = vmin.f32 %v1206, 20.0
        %v1227 = vmin.f32 %v1207, 20.0
        %v1228 = vmin.f32 %v1208, 20.0
        %vm1229 = vcmp.gt.f32.partialorder %v1189, 20.0
        %vm1230 = vcmp.gt.f32.partialorder %v1190, 20.0
        %vm1231 = vcmp.gt.f32.partialorder %v1191, 20.0
        %vm1232 = vcmp.gt.f32.partialorder %v1192, 20.0
        %vm1233 = vcmp.gt.f32.partialorder %v1193, 20.0
        %vm1234 = vcmp.gt.f32.partialorder %v1194, 20.0
        %vm1235 = vcmp.gt.f32.partialorder %v1195, 20.0
        %vm1236 = vcmp.gt.f32.partialorder %v1196, 20.0
        %vm1237 = vcmp.gt.f32.partialorder %v1197, 20.0
        %vm1238 = vcmp.gt.f32.partialorder %v1198, 20.0
        %vm1239 = vcmp.gt.f32.partialorder %v1199, 20.0
        %vm1240 = vcmp.gt.f32.partialorder %v1200, 20.0
        %vm1241 = vcmp.gt.f32.partialorder %v1201, 20.0
        %vm1242 = vcmp.gt.f32.partialorder %v1202, 20.0
        %vm1243 = vcmp.gt.f32.partialorder %v1203, 20.0
        %vm1244 = vcmp.gt.f32.partialorder %v1204, 20.0
        %vm1245 = vcmp.gt.f32.partialorder %v1205, 20.0
        %vm1246 = vcmp.gt.f32.partialorder %v1206, 20.0
        %vm1247 = vcmp.gt.f32.partialorder %v1207, 20.0
        %vm1248 = vcmp.gt.f32.partialorder %v1208, 20.0
        %v1249 = vmul.f32 %v1209, 1.442695
        %v1250 = vpow.pop %v1249
        %v1251 = vmul.f32 %v1210, 1.442695
        %v1252 = vpow.pop %v1251
        %v1253 = vmul.f32 %v1211, 1.442695
        %v1254 = vpow.pop %v1253
        %v1255 = vmul.f32 %v1212, 1.442695
        %v1256 = vpow.pop %v1255
        %v1257 = vmul.f32 %v1213, 1.442695
        %v1258 = vpow.pop %v1257
        %v1259 = vmul.f32 %v1214, 1.442695
        %v1260 = vpow.pop %v1259
        %v1261 = vmul.f32 %v1215, 1.442695
        %v1262 = vpow.pop %v1261
        %v1263 = vmul.f32 %v1216, 1.442695
        %v1264 = vpow.pop %v1263
        %v1265 = vmul.f32 %v1217, 1.442695
        %v1266 = vpow.pop %v1265
        %v1267 = vmul.f32 %v1218, 1.442695
        %v1268 = vpow.pop %v1267
        %v1269 = vmul.f32 %v1219, 1.442695
        %v1270 = vpow.pop %v1269
        %v1271 = vmul.f32 %v1220, 1.442695
        %v1272 = vpow.pop %v1271
        %v1273 = vmul.f32 %v1221, 1.442695
        %v1274 = vpow.pop %v1273
        %v1275 = vmul.f32 %v1222, 1.442695
        %v1276 = vpow.pop %v1275
        %v1277 = vmul.f32 %v1223, 1.442695
        %v1278 = vpow.pop %v1277
        %v1279 = vmul.f32 %v1224, 1.442695
        %v1280 = vpow.pop %v1279
        %v1281 = vmul.f32 %v1225, 1.442695
        %v1282 = vpow.pop %v1281
        %v1283 = vmul.f32 %v1226, 1.442695
        %v1284 = vpow.pop %v1283
        %v1285 = vmul.f32 %v1227, 1.442695
        %v1286 = vpow.pop %v1285
        %v1287 = vmul.f32 %v1228, 1.442695
        %v1288 = vpow.pop %v1287
        %v1289 = vadd.f32 %v1250, 1.0
        %v1290 = vlog2.pop %v1289
        %v1291 = vmul.f32 %v1290, 0.6931472
        %v1292 = vmul.f32 -0.5, %v1250
        %v1293 = vadd.f32 %v1292, 1.0
        %v1294 = vmul.f32 %v1293, %v1250
        %v1295 = vand.u32 2147483647, %v1250
        %vm1296 = vcmp.lt.f32.partialorder %v1295, 0.0004427343
        %v1297 = vsel %vm1296, %v1294, %v1291
        %v1298 = vadd.f32 %v1252, 1.0
        %v1299 = vlog2.pop %v1298
        %v1300 = vmul.f32 %v1299, 0.6931472
        %v1301 = vmul.f32 -0.5, %v1252
        %v1302 = vadd.f32 %v1301, 1.0
        %v1303 = vmul.f32 %v1302, %v1252
        %v1304 = vand.u32 2147483647, %v1252
        %vm1305 = vcmp.lt.f32.partialorder %v1304, 0.0004427343
        %v1306 = vsel %vm1305, %v1303, %v1300
        %v1307 = vadd.f32 %v1254, 1.0
        %v1308 = vlog2.pop %v1307
        %v1309 = vmul.f32 %v1308, 0.6931472
        %v1310 = vmul.f32 -0.5, %v1254
        %v1311 = vadd.f32 %v1310, 1.0
        %v1312 = vmul.f32 %v1311, %v1254
        %v1313 = vand.u32 2147483647, %v1254
        %vm1314 = vcmp.lt.f32.partialorder %v1313, 0.0004427343
        %v1315 = vsel %vm1314, %v1312, %v1309
        %v1316 = vadd.f32 %v1256, 1.0
        %v1317 = vlog2.pop %v1316
        %v1318 = vmul.f32 %v1317, 0.6931472
        %v1319 = vmul.f32 -0.5, %v1256
        %v1320 = vadd.f32 %v1319, 1.0
        %v1321 = vmul.f32 %v1320, %v1256
        %v1322 = vand.u32 2147483647, %v1256
        %vm1323 = vcmp.lt.f32.partialorder %v1322, 0.0004427343
        %v1324 = vsel %vm1323, %v1321, %v1318
        %v1325 = vadd.f32 %v1258, 1.0
        %v1326 = vlog2.pop %v1325
        %v1327 = vmul.f32 %v1326, 0.6931472
        %v1328 = vmul.f32 -0.5, %v1258
        %v1329 = vadd.f32 %v1328, 1.0
        %v1330 = vmul.f32 %v1329, %v1258
        %v1331 = vand.u32 2147483647, %v1258
        %vm1332 = vcmp.lt.f32.partialorder %v1331, 0.0004427343
        %v1333 = vsel %vm1332, %v1330, %v1327
        %v1334 = vadd.f32 %v1260, 1.0
        %v1335 = vlog2.pop %v1334
        %v1336 = vmul.f32 %v1335, 0.6931472
        %v1337 = vmul.f32 -0.5, %v1260
        %v1338 = vadd.f32 %v1337, 1.0
        %v1339 = vmul.f32 %v1338, %v1260
        %v1340 = vand.u32 2147483647, %v1260
        %vm1341 = vcmp.lt.f32.partialorder %v1340, 0.0004427343
        %v1342 = vsel %vm1341, %v1339, %v1336
        %v1343 = vadd.f32 %v1262, 1.0
        %v1344 = vlog2.pop %v1343
        %v1345 = vmul.f32 %v1344, 0.6931472
        %v1346 = vmul.f32 -0.5, %v1262
        %v1347 = vadd.f32 %v1346, 1.0
        %v1348 = vmul.f32 %v1347, %v1262
        %v1349 = vand.u32 2147483647, %v1262
        %vm1350 = vcmp.lt.f32.partialorder %v1349, 0.0004427343
        %v1351 = vsel %vm1350, %v1348, %v1345
        %v1352 = vadd.f32 %v1264, 1.0
        %v1353 = vlog2.pop %v1352
        %v1354 = vmul.f32 %v1353, 0.6931472
        %v1355 = vmul.f32 -0.5, %v1264
        %v1356 = vadd.f32 %v1355, 1.0
        %v1357 = vmul.f32 %v1356, %v1264
        %v1358 = vand.u32 2147483647, %v1264
        %vm1359 = vcmp.lt.f32.partialorder %v1358, 0.0004427343
        %v1360 = vsel %vm1359, %v1357, %v1354
        %v1361 = vadd.f32 %v1266, 1.0
        %v1362 = vlog2.pop %v1361
        %v1363 = vmul.f32 %v1362, 0.6931472
        %v1364 = vmul.f32 -0.5, %v1266
        %v1365 = vadd.f32 %v1364, 1.0
        %v1366 = vmul.f32 %v1365, %v1266
        %v1367 = vand.u32 2147483647, %v1266
        %vm1368 = vcmp.lt.f32.partialorder %v1367, 0.0004427343
        %v1369 = vsel %vm1368, %v1366, %v1363
        %v1370 = vadd.f32 %v1268, 1.0
        %v1371 = vlog2.pop %v1370
        %v1372 = vmul.f32 %v1371, 0.6931472
        %v1373 = vmul.f32 -0.5, %v1268
        %v1374 = vadd.f32 %v1373, 1.0
        %v1375 = vmul.f32 %v1374, %v1268
        %v1376 = vand.u32 2147483647, %v1268
        %vm1377 = vcmp.lt.f32.partialorder %v1376, 0.0004427343
        %v1378 = vsel %vm1377, %v1375, %v1372
        %v1379 = vadd.f32 %v1270, 1.0
        %v1380 = vlog2.pop %v1379
        %v1381 = vmul.f32 %v1380, 0.6931472
        %v1382 = vmul.f32 -0.5, %v1270
        %v1383 = vadd.f32 %v1382, 1.0
        %v1384 = vmul.f32 %v1383, %v1270
        %v1385 = vand.u32 2147483647, %v1270
        %vm1386 = vcmp.lt.f32.partialorder %v1385, 0.0004427343
        %v1387 = vsel %vm1386, %v1384, %v1381
        %v1388 = vadd.f32 %v1272, 1.0
        %v1389 = vlog2.pop %v1388
        %v1390 = vmul.f32 %v1389, 0.6931472
        %v1391 = vmul.f32 -0.5, %v1272
        %v1392 = vadd.f32 %v1391, 1.0
        %v1393 = vmul.f32 %v1392, %v1272
        %v1394 = vand.u32 2147483647, %v1272
        %vm1395 = vcmp.lt.f32.partialorder %v1394, 0.0004427343
        %v1396 = vsel %vm1395, %v1393, %v1390
        %v1397 = vadd.f32 %v1274, 1.0
        %v1398 = vlog2.pop %v1397
        %v1399 = vmul.f32 %v1398, 0.6931472
        %v1400 = vmul.f32 -0.5, %v1274
        %v1401 = vadd.f32 %v1400, 1.0
        %v1402 = vmul.f32 %v1401, %v1274
        %v1403 = vand.u32 2147483647, %v1274
        %vm1404 = vcmp.lt.f32.partialorder %v1403, 0.0004427343
        %v1405 = vsel %vm1404, %v1402, %v1399
        %v1406 = vadd.f32 %v1276, 1.0
        %v1407 = vlog2.pop %v1406
        %v1408 = vmul.f32 %v1407, 0.6931472
        %v1409 = vmul.f32 -0.5, %v1276
        %v1410 = vadd.f32 %v1409, 1.0
        %v1411 = vmul.f32 %v1410, %v1276
        %v1412 = vand.u32 2147483647, %v1276
        %vm1413 = vcmp.lt.f32.partialorder %v1412, 0.0004427343
        %v1414 = vsel %vm1413, %v1411, %v1408
        %v1415 = vadd.f32 %v1278, 1.0
        %v1416 = vlog2.pop %v1415
        %v1417 = vmul.f32 %v1416, 0.6931472
        %v1418 = vmul.f32 -0.5, %v1278
        %v1419 = vadd.f32 %v1418, 1.0
        %v1420 = vmul.f32 %v1419, %v1278
        %v1421 = vand.u32 2147483647, %v1278
        %vm1422 = vcmp.lt.f32.partialorder %v1421, 0.0004427343
        %v1423 = vsel %vm1422, %v1420, %v1417
        %v1424 = vadd.f32 %v1280, 1.0
        %v1425 = vlog2.pop %v1424
        %v1426 = vmul.f32 %v1425, 0.6931472
        %v1427 = vmul.f32 -0.5, %v1280
        %v1428 = vadd.f32 %v1427, 1.0
        %v1429 = vmul.f32 %v1428, %v1280
        %v1430 = vand.u32 2147483647, %v1280
        %vm1431 = vcmp.lt.f32.partialorder %v1430, 0.0004427343
        %v1432 = vsel %vm1431, %v1429, %v1426
        %v1433 = vadd.f32 %v1282, 1.0
        %v1434 = vlog2.pop %v1433
        %v1435 = vmul.f32 %v1434, 0.6931472
        %v1436 = vmul.f32 -0.5, %v1282
        %v1437 = vadd.f32 %v1436, 1.0
        %v1438 = vmul.f32 %v1437, %v1282
        %v1439 = vand.u32 2147483647, %v1282
        %vm1440 = vcmp.lt.f32.partialorder %v1439, 0.0004427343
        %v1441 = vsel %vm1440, %v1438, %v1435
        %v1442 = vadd.f32 %v1284, 1.0
        %v1443 = vlog2.pop %v1442
        %v1444 = vmul.f32 %v1443, 0.6931472
        %v1445 = vmul.f32 -0.5, %v1284
        %v1446 = vadd.f32 %v1445, 1.0
        %v1447 = vmul.f32 %v1446, %v1284
        %v1448 = vand.u32 2147483647, %v1284
        %vm1449 = vcmp.lt.f32.partialorder %v1448, 0.0004427343
        %v1450 = vsel %vm1449, %v1447, %v1444
        %v1451 = vadd.f32 %v1286, 1.0
        %v1452 = vlog2.pop %v1451
        %v1453 = vmul.f32 %v1452, 0.6931472
        %v1454 = vmul.f32 -0.5, %v1286
        %v1455 = vadd.f32 %v1454, 1.0
        %v1456 = vmul.f32 %v1455, %v1286
        %v1457 = vand.u32 2147483647, %v1286
        %vm1458 = vcmp.lt.f32.partialorder %v1457, 0.0004427343
        %v1459 = vsel %vm1458, %v1456, %v1453
        %v1460 = vadd.f32 %v1288, 1.0
        %v1461 = vlog2.pop %v1460
        %v1462 = vmul.f32 %v1461, 0.6931472
        %v1463 = vmul.f32 -0.5, %v1288
        %v1464 = vadd.f32 %v1463, 1.0
        %v1465 = vmul.f32 %v1464, %v1288
        %v1466 = vand.u32 2147483647, %v1288
        %vm1467 = vcmp.lt.f32.partialorder %v1466, 0.0004427343
        %v1468 = vsel %vm1467, %v1465, %v1462
        %v1469 = vmul.f32 %v1297, 0.01
        %v1470 = vmul.f32 %v1306, 0.01
        %v1471 = vmul.f32 %v1315, 0.01
        %v1472 = vmul.f32 %v1324, 0.01
        %v1473 = vmul.f32 %v1333, 0.01
        %v1474 = vmul.f32 %v1342, 0.01
        %v1475 = vmul.f32 %v1351, 0.01
        %v1476 = vmul.f32 %v1360, 0.01
        %v1477 = vmul.f32 %v1369, 0.01
        %v1478 = vmul.f32 %v1378, 0.01
        %v1479 = vmul.f32 %v1387, 0.01
        %v1480 = vmul.f32 %v1396, 0.01
        %v1481 = vmul.f32 %v1405, 0.01
        %v1482 = vmul.f32 %v1414, 0.01
        %v1483 = vmul.f32 %v1423, 0.01
        %v1484 = vmul.f32 %v1432, 0.01
        %v1485 = vmul.f32 %v1441, 0.01
        %v1486 = vmul.f32 %v1450, 0.01
        %v1487 = vmul.f32 %v1459, 0.01
        %v1488 = vmul.f32 %v1468, 0.01
        %v1489 = vsel %vm1229, %v1066, %v1469
        %v1490 = vsel %vm1230, %v1068, %v1470
        %v1491 = vsel %vm1231, %v1161, %v1471
        %v1492 = vsel %vm1232, %v1163, %v1472
        %v1493 = vsel %vm1233, %v1072, %v1473
        %v1494 = vsel %vm1234, %v1074, %v1474
        %v1495 = vsel %vm1235, %v1167, %v1475
        %v1496 = vsel %vm1236, %v1169, %v1476
        %v1497 = vsel %vm1237, %v1078, %v1477
        %v1498 = vsel %vm1238, %v1080, %v1478
        %v1499 = vsel %vm1239, %v1173, %v1479
        %v1500 = vsel %vm1240, %v1175, %v1480
        %v1501 = vsel %vm1241, %v1084, %v1481
        %v1502 = vsel %vm1242, %v1086, %v1482
        %v1503 = vsel %vm1243, %v1179, %v1483
        %v1504 = vsel %vm1244, %v1181, %v1484
        %v1505 = vsel %vm1245, %v1090, %v1485
        %v1506 = vsel %vm1246, %v1092, %v1486
        %v1507 = vsel %vm1247, %v1185, %v1487
        %v1508 = vsel %vm1248, %v1187, %v1488
        %1509 = vst [vmem:[#allocation2 + $0x20] sm:$0xff] %v1489
        %1510 = vst [vmem:[#allocation2 + $0x28] sm:$0xff] %v1490
        %1511 = vst [vmem:[#allocation2 + $0x30] sm:$0xff] %v1491
        %1512 = vst [vmem:[#allocation2 + $0x38] sm:$0xff] %v1492
        %1513 = vst [vmem:[#allocation2 + $0x40] sm:$0xff] %v1493
        %1514 = vst [vmem:[#allocation2 + $0x48] sm:$0xff] %v1494
        %1515 = vst [vmem:[#allocation2 + $0x50] sm:$0xff] %v1495
        %1516 = vst [vmem:[#allocation2 + $0x58] sm:$0xff] %v1496
        %1517 = vst [vmem:[#allocation2 + $0x60] sm:$0xff] %v1497
        %1518 = vst [vmem:[#allocation2 + $0x68] sm:$0xff] %v1498
        %1519 = vst [vmem:[#allocation2 + $0x70] sm:$0xff] %v1499
        %1520 = vst [vmem:[#allocation2 + $0x78] sm:$0xff] %v1500
        %1521 = vst [vmem:[#allocation2 + $0x80] sm:$0xff] %v1501
        %1522 = vst [vmem:[#allocation2 + $0x88] sm:$0xff] %v1502
        %1523 = vst [vmem:[#allocation2 + $0x90] sm:$0xff] %v1503
        %1524 = vst [vmem:[#allocation2 + $0x98] sm:$0xff] %v1504
        %1525 = vst [vmem:[#allocation2 + $0xa0] sm:$0xf] %v1505
        %1526 = vst [vmem:[#allocation2 + $0xa8] sm:$0xf] %v1506
        %1527 = vst [vmem:[#allocation2 + $0xb0] sm:$0xf] %v1507
        %1528 = vst [vmem:[#allocation2 + $0xb8] sm:$0xf] %v1508
        %v1529 = vld [vmem:[%s1 + $0x10] sm:$0xff]
        %v1530 = vld [vmem:[%s1 + $0x30] sm:$0xff]
        %v1531 = vld [vmem:[%s1 + $0x50] sm:$0xff]
        %v1532 = vld [vmem:[%s1 + $0x70] sm:$0xff]
        %v1533 = vld [vmem:[%s1 + $0x90] sm:$0xff]
        %v1534 = vld [vmem:[%s2] sm:$0xff]
        %v1535 = vld [vmem:[%s2 + $0x8] sm:$0xff]
        %v1536 = vld [vmem:[%s2 + $0x10] sm:$0xff]
        %v1537 = vld [vmem:[%s2 + $0x18] sm:$0xff]
        %v1538 = vld [vmem:[%s2 + $0x20] sm:$0xff]
        %v1539 = vld [vmem:[#allocation2] sm:$0xff]
        %v1540 = vld [vmem:[#allocation2 + $0x8] sm:$0xff]
        %v1541 = vld [vmem:[#allocation2 + $0x10] sm:$0xff]
        %v1542 = vld [vmem:[#allocation2 + $0x18] sm:$0xff]
        %v1543 = vld [vmem:[#allocation2 + $0x20] sm:$0xff]
        %v1544 = vld [vmem:[#allocation2 + $0x28] sm:$0xff]
        %v1545 = vld [vmem:[#allocation2 + $0x30] sm:$0xff]
        %v1546 = vld [vmem:[#allocation2 + $0x38] sm:$0xff]
        %v1547 = vld [vmem:[#allocation2 + $0x40] sm:$0xff]
        %v1548 = vld [vmem:[#allocation2 + $0x48] sm:$0xff]
        %v1549 = vld [vmem:[#allocation2 + $0x50] sm:$0xff]
        %v1550 = vld [vmem:[#allocation2 + $0x58] sm:$0xff]
        %v1551 = vld [vmem:[#allocation2 + $0x60] sm:$0xff]
        %v1552 = vld [vmem:[#allocation2 + $0x68] sm:$0xff]
        %v1553 = vld [vmem:[#allocation2 + $0x70] sm:$0xff]
        %v1554 = vld [vmem:[#allocation2 + $0x78] sm:$0xff]
        %v1555 = vld [vmem:[#allocation2 + $0x80] sm:$0xff]
        %v1556 = vld [vmem:[#allocation2 + $0x88] sm:$0xff]
        %v1557 = vld [vmem:[#allocation2 + $0x90] sm:$0xff]
        %v1558 = vld [vmem:[#allocation2 + $0x98] sm:$0xff]
        %v1559 = vld [vmem:[#allocation2 + $0xa0] sm:$0xf]
        %v1560 = vld [vmem:[#allocation2 + $0xa8] sm:$0xf]
        %v1561 = vld [vmem:[#allocation2 + $0xb0] sm:$0xf]
        %v1562 = vld [vmem:[#allocation2 + $0xb8] sm:$0xf]
        %1564 = vset.pattern.permute.xlu0 2
        %1565 = vperm.xlu0 %1564, %v1534
        %v1566 = vpop.permute.xlu0 %1565
        %1569 = vset.pattern.permute.xlu0 2
        %1570 = vperm.xlu0 %1569, %v1535
        %v1571 = vpop.permute.xlu0 %1570
        %1574 = vset.pattern.permute.xlu0 2
        %1575 = vperm.xlu0 %1574, %v1536
        %v1576 = vpop.permute.xlu0 %1575
        %1579 = vset.pattern.permute.xlu0 2
        %1580 = vperm.xlu0 %1579, %v1537
        %v1581 = vpop.permute.xlu0 %1580
        %1584 = vset.pattern.permute.xlu0 2
        %1585 = vperm.xlu0 %1584, %v1538
        %v1586 = vpop.permute.xlu0 %1585
        %vm1588 = vcmask 359424
        %v1590 = vsel %vm1588, %v1529, 0
        %v1593 = vsel %vm1588, %v1530, 0
        %v1596 = vsel %vm1588, %v1531, 0
        %v1599 = vsel %vm1588, %v1532, 0
        %v1602 = vsel %vm1588, %v1533, 0
        %v1605 = vsel %vm364, %v1559, 0
        %v1608 = vsel %vm364, %v1560, 0
        %v1611 = vsel %vm364, %v1561, 0
        %v1614 = vsel %vm364, %v1562, 0
        %1616 = vmatprep.subr.mxu0 0.0
        %1617 = vmatpush1.msra.mxu0 0.0
        %1618 = vmatprep.subr.mxu0 0.0
        %1619 = vmatpush1.msra.mxu0 0.0
        %1620 = vmatprep.subr.mxu0 0.0
        %1621 = vmatpush1.msra.mxu0 0.0
        %1622 = vmatprep.subr.mxu0 0.0
        %1623 = vmatpush1.msra.mxu0 0.0
        %1624 = vmatprep.subr.mxu0 0.0
        %1625 = vmatpush1.msra.mxu0 0.0
        %1626 = vmatprep.subr.mxu0 0.0
        %1627 = vmatpush1.msra.mxu0 0.0
        %1628 = vmatprep.subr.mxu0 0.0
        %1629 = vmatpush1.msra.mxu0 0.0
        %1630 = vmatprep.subr.mxu0 0.0
        %1631 = vmatpush1.msra.mxu0 0.0
        %1632 = vmatprep.subr.mxu0 0.0
        %1633 = vmatpush1.msra.mxu0 0.0
        %1634 = vmatprep.subr.mxu0 0.0
        %1635 = vmatpush1.msra.mxu0 0.0
        %1636 = vmatprep.subr.mxu0 %v1608
        %1637 = vmatpush1.msra.mxu0 %v1605
        %1638 = vmatprep.subr.mxu0 %v1556
        %1639 = vmatpush1.msra.mxu0 %v1555
        %1640 = vmatprep.subr.mxu0 %v1552
        %1641 = vmatpush1.msra.mxu0 %v1551
        %1642 = vmatprep.subr.mxu0 %v1548
        %1643 = vmatpush1.msra.mxu0 %v1547
        %1644 = vmatprep.subr.mxu0 %v1544
        %1645 = vmatpush1.msra.mxu0 %v1543
        %1646 = vmatprep.subr.mxu0 %v1540
        %1647 = vmatpush1.msra.mxu0 %v1539
        %1648 = vmatprep.subr.mxu0 0.0
        %1649 = vmatpush2.msra.mxu0 0.0
        %1650 = vmatprep.subr.mxu0 0.0
        %1651 = vmatpush2.msra.mxu0 0.0
        %1652 = vmatprep.subr.mxu0 0.0
        %1653 = vmatpush2.msra.mxu0 0.0
        %1654 = vmatprep.subr.mxu0 0.0
        %1655 = vmatpush2.msra.mxu0 0.0
        %1656 = vmatprep.subr.mxu0 0.0
        %1657 = vmatpush2.msra.mxu0 0.0
        %1658 = vmatprep.subr.mxu0 0.0
        %1659 = vmatpush2.msra.mxu0 0.0
        %1660 = vmatprep.subr.mxu0 0.0
        %1661 = vmatpush2.msra.mxu0 0.0
        %1662 = vmatprep.subr.mxu0 0.0
        %1663 = vmatpush2.msra.mxu0 0.0
        %1664 = vmatprep.subr.mxu0 0.0
        %1665 = vmatpush2.msra.mxu0 0.0
        %1666 = vmatprep.subr.mxu0 0.0
        %1667 = vmatpush2.msra.mxu0 0.0
        %1668 = vmatprep.subr.mxu0 0.0
        %1669 = vmatpush2.msra.mxu0 0.0
        %1670 = vmatprep.subr.mxu0 0.0
        %1671 = vmatpush2.msra.mxu0 0.0
        %1672 = vmatprep.subr.mxu0 0.0
        %1673 = vmatpush2.msra.mxu0 0.0
        %1674 = vmatprep.subr.mxu0 0.0
        %1675 = vmatpush2.msra.mxu0 0.0
        %1676 = vmatprep.subr.mxu0 0.0
        %1677 = vmatpush2.msra.mxu0 0.0
        %1678 = vmatprep.subr.mxu0 0.0
        %1679 = vmatpush2.msra.mxu0 0.0
        %1680 = vmatprep.mubr.f32.mxu0 0.0
        %1681 = vmatmul.mubr.f32.gmra.mxu0 %v1590
        %v1682 = vpop.f32.mrf.mxu0
        %v1683 = vadd.f32 %v1566, %v1682
        %v1684 = vpop.f32.mrf.mxu0
        %v1685 = vadd.f32 %v1566, %v1684
        %1686 = vmatprep.mubr.f32.mxu0 0.0
        %1687 = vmatmul.mubr.f32.gmra.mxu0 %v1593
        %v1688 = vpop.f32.mrf.mxu0
        %v1689 = vadd.f32 %v1571, %v1688
        %v1690 = vpop.f32.mrf.mxu0
        %v1691 = vadd.f32 %v1571, %v1690
        %1692 = vmatprep.mubr.f32.mxu0 0.0
        %1693 = vmatmul.mubr.f32.gmra.mxu0 %v1596
        %v1694 = vpop.f32.mrf.mxu0
        %v1695 = vadd.f32 %v1576, %v1694
        %v1696 = vpop.f32.mrf.mxu0
        %v1697 = vadd.f32 %v1576, %v1696
        %1698 = vmatprep.mubr.f32.mxu0 0.0
        %1699 = vmatmul.mubr.f32.gmra.mxu0 %v1599
        %v1700 = vpop.f32.mrf.mxu0
        %v1701 = vadd.f32 %v1581, %v1700
        %v1702 = vpop.f32.mrf.mxu0
        %v1703 = vadd.f32 %v1581, %v1702
        %1704 = vmatprep.mubr.f32.mxu0 0.0
        %1705 = vmatmul.mubr.f32.gmra.mxu0 %v1602
        %v1706 = vpop.f32.mrf.mxu0
        %v1707 = vadd.f32 %v1586, %v1706
        %v1708 = vpop.f32.mrf.mxu0
        %v1709 = vadd.f32 %v1586, %v1708
        %1710 = vdwg.mxu0
        %1711 = vmatprep.subr.mxu0 0.0
        %1712 = vmatpush1.msra.mxu0 0.0
        %1713 = vmatprep.subr.mxu0 0.0
        %1714 = vmatpush1.msra.mxu0 0.0
        %1715 = vmatprep.subr.mxu0 0.0
        %1716 = vmatpush1.msra.mxu0 0.0
        %1717 = vmatprep.subr.mxu0 0.0
        %1718 = vmatpush1.msra.mxu0 0.0
        %1719 = vmatprep.subr.mxu0 0.0
        %1720 = vmatpush1.msra.mxu0 0.0
        %1721 = vmatprep.subr.mxu0 0.0
        %1722 = vmatpush1.msra.mxu0 0.0
        %1723 = vmatprep.subr.mxu0 0.0
        %1724 = vmatpush1.msra.mxu0 0.0
        %1725 = vmatprep.subr.mxu0 0.0
        %1726 = vmatpush1.msra.mxu0 0.0
        %1727 = vmatprep.subr.mxu0 0.0
        %1728 = vmatpush1.msra.mxu0 0.0
        %1729 = vmatprep.subr.mxu0 0.0
        %1730 = vmatpush1.msra.mxu0 0.0
        %1731 = vmatprep.subr.mxu0 %v1614
        %1732 = vmatpush1.msra.mxu0 %v1611
        %1733 = vmatprep.subr.mxu0 %v1558
        %1734 = vmatpush1.msra.mxu0 %v1557
        %1735 = vmatprep.subr.mxu0 %v1554
        %1736 = vmatpush1.msra.mxu0 %v1553
        %1737 = vmatprep.subr.mxu0 %v1550
        %1738 = vmatpush1.msra.mxu0 %v1549
        %1739 = vmatprep.subr.mxu0 %v1546
        %1740 = vmatpush1.msra.mxu0 %v1545
        %1741 = vmatprep.subr.mxu0 %v1542
        %1742 = vmatpush1.msra.mxu0 %v1541
        %1743 = vmatprep.subr.mxu0 0.0
        %1744 = vmatpush2.msra.mxu0 0.0
        %1745 = vmatprep.subr.mxu0 0.0
        %1746 = vmatpush2.msra.mxu0 0.0
        %1747 = vmatprep.subr.mxu0 0.0
        %1748 = vmatpush2.msra.mxu0 0.0
        %1749 = vmatprep.subr.mxu0 0.0
        %1750 = vmatpush2.msra.mxu0 0.0
        %1751 = vmatprep.subr.mxu0 0.0
        %1752 = vmatpush2.msra.mxu0 0.0
        %1753 = vmatprep.subr.mxu0 0.0
        %1754 = vmatpush2.msra.mxu0 0.0
        %1755 = vmatprep.subr.mxu0 0.0
        %1756 = vmatpush2.msra.mxu0 0.0
        %1757 = vmatprep.subr.mxu0 0.0
        %1758 = vmatpush2.msra.mxu0 0.0
        %1759 = vmatprep.subr.mxu0 0.0
        %1760 = vmatpush2.msra.mxu0 0.0
        %1761 = vmatprep.subr.mxu0 0.0
        %1762 = vmatpush2.msra.mxu0 0.0
        %1763 = vmatprep.subr.mxu0 0.0
        %1764 = vmatpush2.msra.mxu0 0.0
        %1765 = vmatprep.subr.mxu0 0.0
        %1766 = vmatpush2.msra.mxu0 0.0
        %1767 = vmatprep.subr.mxu0 0.0
        %1768 = vmatpush2.msra.mxu0 0.0
        %1769 = vmatprep.subr.mxu0 0.0
        %1770 = vmatpush2.msra.mxu0 0.0
        %1771 = vmatprep.subr.mxu0 0.0
        %1772 = vmatpush2.msra.mxu0 0.0
        %1773 = vmatprep.subr.mxu0 0.0
        %1774 = vmatpush2.msra.mxu0 0.0
        %1775 = vmatprep.mubr.f32.mxu0 0.0
        %1776 = vmatmul.mubr.f32.gmra.mxu0 %v1590
        %v1777 = vpop.f32.mrf.mxu0
        %v1778 = vadd.f32 %v1566, %v1777
        %v1779 = vpop.f32.mrf.mxu0
        %v1780 = vadd.f32 %v1566, %v1779
        %1781 = vmatprep.mubr.f32.mxu0 0.0
        %1782 = vmatmul.mubr.f32.gmra.mxu0 %v1593
        %v1783 = vpop.f32.mrf.mxu0
        %v1784 = vadd.f32 %v1571, %v1783
        %v1785 = vpop.f32.mrf.mxu0
        %v1786 = vadd.f32 %v1571, %v1785
        %1787 = vmatprep.mubr.f32.mxu0 0.0
        %1788 = vmatmul.mubr.f32.gmra.mxu0 %v1596
        %v1789 = vpop.f32.mrf.mxu0
        %v1790 = vadd.f32 %v1576, %v1789
        %v1791 = vpop.f32.mrf.mxu0
        %v1792 = vadd.f32 %v1576, %v1791
        %1793 = vmatprep.mubr.f32.mxu0 0.0
        %1794 = vmatmul.mubr.f32.gmra.mxu0 %v1599
        %v1795 = vpop.f32.mrf.mxu0
        %v1796 = vadd.f32 %v1581, %v1795
        %v1797 = vpop.f32.mrf.mxu0
        %v1798 = vadd.f32 %v1581, %v1797
        %1799 = vmatprep.mubr.f32.mxu0 0.0
        %1800 = vmatmul.mubr.f32.gmra.mxu0 %v1602
        %v1801 = vpop.f32.mrf.mxu0
        %v1802 = vadd.f32 %v1586, %v1801
        %v1803 = vpop.f32.mrf.mxu0
        %v1804 = vadd.f32 %v1586, %v1803
        %1805 = vdwg.mxu0
        %v1806 = vmul.f32 %v1683, 100.0
        %v1807 = vmul.f32 %v1685, 100.0
        %v1808 = vmul.f32 %v1778, 100.0
        %v1809 = vmul.f32 %v1780, 100.0
        %v1810 = vmul.f32 %v1689, 100.0
        %v1811 = vmul.f32 %v1691, 100.0
        %v1812 = vmul.f32 %v1784, 100.0
        %v1813 = vmul.f32 %v1786, 100.0
        %v1814 = vmul.f32 %v1695, 100.0
        %v1815 = vmul.f32 %v1697, 100.0
        %v1816 = vmul.f32 %v1790, 100.0
        %v1817 = vmul.f32 %v1792, 100.0
        %v1818 = vmul.f32 %v1701, 100.0
        %v1819 = vmul.f32 %v1703, 100.0
        %v1820 = vmul.f32 %v1796, 100.0
        %v1821 = vmul.f32 %v1798, 100.0
        %v1822 = vmul.f32 %v1707, 100.0
        %v1823 = vmul.f32 %v1709, 100.0
        %v1824 = vmul.f32 %v1802, 100.0
        %v1825 = vmul.f32 %v1804, 100.0
        %v1826 = vmin.f32 %v1806, 20.0
        %v1827 = vmin.f32 %v1807, 20.0
        %v1828 = vmin.f32 %v1808, 20.0
        %v1829 = vmin.f32 %v1809, 20.0
        %v1830 = vmin.f32 %v1810, 20.0
        %v1831 = vmin.f32 %v1811, 20.0
        %v1832 = vmin.f32 %v1812, 20.0
        %v1833 = vmin.f32 %v1813, 20.0
        %v1834 = vmin.f32 %v1814, 20.0
        %v1835 = vmin.f32 %v1815, 20.0
        %v1836 = vmin.f32 %v1816, 20.0
        %v1837 = vmin.f32 %v1817, 20.0
        %v1838 = vmin.f32 %v1818, 20.0
        %v1839 = vmin.f32 %v1819, 20.0
        %v1840 = vmin.f32 %v1820, 20.0
        %v1841 = vmin.f32 %v1821, 20.0
        %v1842 = vmin.f32 %v1822, 20.0
        %v1843 = vmin.f32 %v1823, 20.0
        %v1844 = vmin.f32 %v1824, 20.0
        %v1845 = vmin.f32 %v1825, 20.0
        %vm1846 = vcmp.gt.f32.partialorder %v1806, 20.0
        %vm1847 = vcmp.gt.f32.partialorder %v1807, 20.0
        %vm1848 = vcmp.gt.f32.partialorder %v1808, 20.0
        %vm1849 = vcmp.gt.f32.partialorder %v1809, 20.0
        %vm1850 = vcmp.gt.f32.partialorder %v1810, 20.0
        %vm1851 = vcmp.gt.f32.partialorder %v1811, 20.0
        %vm1852 = vcmp.gt.f32.partialorder %v1812, 20.0
        %vm1853 = vcmp.gt.f32.partialorder %v1813, 20.0
        %vm1854 = vcmp.gt.f32.partialorder %v1814, 20.0
        %vm1855 = vcmp.gt.f32.partialorder %v1815, 20.0
        %vm1856 = vcmp.gt.f32.partialorder %v1816, 20.0
        %vm1857 = vcmp.gt.f32.partialorder %v1817, 20.0
        %vm1858 = vcmp.gt.f32.partialorder %v1818, 20.0
        %vm1859 = vcmp.gt.f32.partialorder %v1819, 20.0
        %vm1860 = vcmp.gt.f32.partialorder %v1820, 20.0
        %vm1861 = vcmp.gt.f32.partialorder %v1821, 20.0
        %vm1862 = vcmp.gt.f32.partialorder %v1822, 20.0
        %vm1863 = vcmp.gt.f32.partialorder %v1823, 20.0
        %vm1864 = vcmp.gt.f32.partialorder %v1824, 20.0
        %vm1865 = vcmp.gt.f32.partialorder %v1825, 20.0
        %v1866 = vmul.f32 %v1826, 1.442695
        %v1867 = vpow.pop %v1866
        %v1868 = vmul.f32 %v1827, 1.442695
        %v1869 = vpow.pop %v1868
        %v1870 = vmul.f32 %v1828, 1.442695
        %v1871 = vpow.pop %v1870
        %v1872 = vmul.f32 %v1829, 1.442695
        %v1873 = vpow.pop %v1872
        %v1874 = vmul.f32 %v1830, 1.442695
        %v1875 = vpow.pop %v1874
        %v1876 = vmul.f32 %v1831, 1.442695
        %v1877 = vpow.pop %v1876
        %v1878 = vmul.f32 %v1832, 1.442695
        %v1879 = vpow.pop %v1878
        %v1880 = vmul.f32 %v1833, 1.442695
        %v1881 = vpow.pop %v1880
        %v1882 = vmul.f32 %v1834, 1.442695
        %v1883 = vpow.pop %v1882
        %v1884 = vmul.f32 %v1835, 1.442695
        %v1885 = vpow.pop %v1884
        %v1886 = vmul.f32 %v1836, 1.442695
        %v1887 = vpow.pop %v1886
        %v1888 = vmul.f32 %v1837, 1.442695
        %v1889 = vpow.pop %v1888
        %v1890 = vmul.f32 %v1838, 1.442695
        %v1891 = vpow.pop %v1890
        %v1892 = vmul.f32 %v1839, 1.442695
        %v1893 = vpow.pop %v1892
        %v1894 = vmul.f32 %v1840, 1.442695
        %v1895 = vpow.pop %v1894
        %v1896 = vmul.f32 %v1841, 1.442695
        %v1897 = vpow.pop %v1896
        %v1898 = vmul.f32 %v1842, 1.442695
        %v1899 = vpow.pop %v1898
        %v1900 = vmul.f32 %v1843, 1.442695
        %v1901 = vpow.pop %v1900
        %v1902 = vmul.f32 %v1844, 1.442695
        %v1903 = vpow.pop %v1902
        %v1904 = vmul.f32 %v1845, 1.442695
        %v1905 = vpow.pop %v1904
        %v1906 = vadd.f32 %v1867, 1.0
        %v1907 = vlog2.pop %v1906
        %v1908 = vmul.f32 %v1907, 0.6931472
        %v1909 = vmul.f32 -0.5, %v1867
        %v1910 = vadd.f32 %v1909, 1.0
        %v1911 = vmul.f32 %v1910, %v1867
        %v1912 = vand.u32 2147483647, %v1867
        %vm1913 = vcmp.lt.f32.partialorder %v1912, 0.0004427343
        %v1914 = vsel %vm1913, %v1911, %v1908
        %v1915 = vadd.f32 %v1869, 1.0
        %v1916 = vlog2.pop %v1915
        %v1917 = vmul.f32 %v1916, 0.6931472
        %v1918 = vmul.f32 -0.5, %v1869
        %v1919 = vadd.f32 %v1918, 1.0
        %v1920 = vmul.f32 %v1919, %v1869
        %v1921 = vand.u32 2147483647, %v1869
        %vm1922 = vcmp.lt.f32.partialorder %v1921, 0.0004427343
        %v1923 = vsel %vm1922, %v1920, %v1917
        %v1924 = vadd.f32 %v1871, 1.0
        %v1925 = vlog2.pop %v1924
        %v1926 = vmul.f32 %v1925, 0.6931472
        %v1927 = vmul.f32 -0.5, %v1871
        %v1928 = vadd.f32 %v1927, 1.0
        %v1929 = vmul.f32 %v1928, %v1871
        %v1930 = vand.u32 2147483647, %v1871
        %vm1931 = vcmp.lt.f32.partialorder %v1930, 0.0004427343
        %v1932 = vsel %vm1931, %v1929, %v1926
        %v1933 = vadd.f32 %v1873, 1.0
        %v1934 = vlog2.pop %v1933
        %v1935 = vmul.f32 %v1934, 0.6931472
        %v1936 = vmul.f32 -0.5, %v1873
        %v1937 = vadd.f32 %v1936, 1.0
        %v1938 = vmul.f32 %v1937, %v1873
        %v1939 = vand.u32 2147483647, %v1873
        %vm1940 = vcmp.lt.f32.partialorder %v1939, 0.0004427343
        %v1941 = vsel %vm1940, %v1938, %v1935
        %v1942 = vadd.f32 %v1875, 1.0
        %v1943 = vlog2.pop %v1942
        %v1944 = vmul.f32 %v1943, 0.6931472
        %v1945 = vmul.f32 -0.5, %v1875
        %v1946 = vadd.f32 %v1945, 1.0
        %v1947 = vmul.f32 %v1946, %v1875
        %v1948 = vand.u32 2147483647, %v1875
        %vm1949 = vcmp.lt.f32.partialorder %v1948, 0.0004427343
        %v1950 = vsel %vm1949, %v1947, %v1944
        %v1951 = vadd.f32 %v1877, 1.0
        %v1952 = vlog2.pop %v1951
        %v1953 = vmul.f32 %v1952, 0.6931472
        %v1954 = vmul.f32 -0.5, %v1877
        %v1955 = vadd.f32 %v1954, 1.0
        %v1956 = vmul.f32 %v1955, %v1877
        %v1957 = vand.u32 2147483647, %v1877
        %vm1958 = vcmp.lt.f32.partialorder %v1957, 0.0004427343
        %v1959 = vsel %vm1958, %v1956, %v1953
        %v1960 = vadd.f32 %v1879, 1.0
        %v1961 = vlog2.pop %v1960
        %v1962 = vmul.f32 %v1961, 0.6931472
        %v1963 = vmul.f32 -0.5, %v1879
        %v1964 = vadd.f32 %v1963, 1.0
        %v1965 = vmul.f32 %v1964, %v1879
        %v1966 = vand.u32 2147483647, %v1879
        %vm1967 = vcmp.lt.f32.partialorder %v1966, 0.0004427343
        %v1968 = vsel %vm1967, %v1965, %v1962
        %v1969 = vadd.f32 %v1881, 1.0
        %v1970 = vlog2.pop %v1969
        %v1971 = vmul.f32 %v1970, 0.6931472
        %v1972 = vmul.f32 -0.5, %v1881
        %v1973 = vadd.f32 %v1972, 1.0
        %v1974 = vmul.f32 %v1973, %v1881
        %v1975 = vand.u32 2147483647, %v1881
        %vm1976 = vcmp.lt.f32.partialorder %v1975, 0.0004427343
        %v1977 = vsel %vm1976, %v1974, %v1971
        %v1978 = vadd.f32 %v1883, 1.0
        %v1979 = vlog2.pop %v1978
        %v1980 = vmul.f32 %v1979, 0.6931472
        %v1981 = vmul.f32 -0.5, %v1883
        %v1982 = vadd.f32 %v1981, 1.0
        %v1983 = vmul.f32 %v1982, %v1883
        %v1984 = vand.u32 2147483647, %v1883
        %vm1985 = vcmp.lt.f32.partialorder %v1984, 0.0004427343
        %v1986 = vsel %vm1985, %v1983, %v1980
        %v1987 = vadd.f32 %v1885, 1.0
        %v1988 = vlog2.pop %v1987
        %v1989 = vmul.f32 %v1988, 0.6931472
        %v1990 = vmul.f32 -0.5, %v1885
        %v1991 = vadd.f32 %v1990, 1.0
        %v1992 = vmul.f32 %v1991, %v1885
        %v1993 = vand.u32 2147483647, %v1885
        %vm1994 = vcmp.lt.f32.partialorder %v1993, 0.0004427343
        %v1995 = vsel %vm1994, %v1992, %v1989
        %v1996 = vadd.f32 %v1887, 1.0
        %v1997 = vlog2.pop %v1996
        %v1998 = vmul.f32 %v1997, 0.6931472
        %v1999 = vmul.f32 -0.5, %v1887
        %v2000 = vadd.f32 %v1999, 1.0
        %v2001 = vmul.f32 %v2000, %v1887
        %v2002 = vand.u32 2147483647, %v1887
        %vm2003 = vcmp.lt.f32.partialorder %v2002, 0.0004427343
        %v2004 = vsel %vm2003, %v2001, %v1998
        %v2005 = vadd.f32 %v1889, 1.0
        %v2006 = vlog2.pop %v2005
        %v2007 = vmul.f32 %v2006, 0.6931472
        %v2008 = vmul.f32 -0.5, %v1889
        %v2009 = vadd.f32 %v2008, 1.0
        %v2010 = vmul.f32 %v2009, %v1889
        %v2011 = vand.u32 2147483647, %v1889
        %vm2012 = vcmp.lt.f32.partialorder %v2011, 0.0004427343
        %v2013 = vsel %vm2012, %v2010, %v2007
        %v2014 = vadd.f32 %v1891, 1.0
        %v2015 = vlog2.pop %v2014
        %v2016 = vmul.f32 %v2015, 0.6931472
        %v2017 = vmul.f32 -0.5, %v1891
        %v2018 = vadd.f32 %v2017, 1.0
        %v2019 = vmul.f32 %v2018, %v1891
        %v2020 = vand.u32 2147483647, %v1891
        %vm2021 = vcmp.lt.f32.partialorder %v2020, 0.0004427343
        %v2022 = vsel %vm2021, %v2019, %v2016
        %v2023 = vadd.f32 %v1893, 1.0
        %v2024 = vlog2.pop %v2023
        %v2025 = vmul.f32 %v2024, 0.6931472
        %v2026 = vmul.f32 -0.5, %v1893
        %v2027 = vadd.f32 %v2026, 1.0
        %v2028 = vmul.f32 %v2027, %v1893
        %v2029 = vand.u32 2147483647, %v1893
        %vm2030 = vcmp.lt.f32.partialorder %v2029, 0.0004427343
        %v2031 = vsel %vm2030, %v2028, %v2025
        %v2032 = vadd.f32 %v1895, 1.0
        %v2033 = vlog2.pop %v2032
        %v2034 = vmul.f32 %v2033, 0.6931472
        %v2035 = vmul.f32 -0.5, %v1895
        %v2036 = vadd.f32 %v2035, 1.0
        %v2037 = vmul.f32 %v2036, %v1895
        %v2038 = vand.u32 2147483647, %v1895
        %vm2039 = vcmp.lt.f32.partialorder %v2038, 0.0004427343
        %v2040 = vsel %vm2039, %v2037, %v2034
        %v2041 = vadd.f32 %v1897, 1.0
        %v2042 = vlog2.pop %v2041
        %v2043 = vmul.f32 %v2042, 0.6931472
        %v2044 = vmul.f32 -0.5, %v1897
        %v2045 = vadd.f32 %v2044, 1.0
        %v2046 = vmul.f32 %v2045, %v1897
        %v2047 = vand.u32 2147483647, %v1897
        %vm2048 = vcmp.lt.f32.partialorder %v2047, 0.0004427343
        %v2049 = vsel %vm2048, %v2046, %v2043
        %v2050 = vadd.f32 %v1899, 1.0
        %v2051 = vlog2.pop %v2050
        %v2052 = vmul.f32 %v2051, 0.6931472
        %v2053 = vmul.f32 -0.5, %v1899
        %v2054 = vadd.f32 %v2053, 1.0
        %v2055 = vmul.f32 %v2054, %v1899
        %v2056 = vand.u32 2147483647, %v1899
        %vm2057 = vcmp.lt.f32.partialorder %v2056, 0.0004427343
        %v2058 = vsel %vm2057, %v2055, %v2052
        %v2059 = vadd.f32 %v1901, 1.0
        %v2060 = vlog2.pop %v2059
        %v2061 = vmul.f32 %v2060, 0.6931472
        %v2062 = vmul.f32 -0.5, %v1901
        %v2063 = vadd.f32 %v2062, 1.0
        %v2064 = vmul.f32 %v2063, %v1901
        %v2065 = vand.u32 2147483647, %v1901
        %vm2066 = vcmp.lt.f32.partialorder %v2065, 0.0004427343
        %v2067 = vsel %vm2066, %v2064, %v2061
        %v2068 = vadd.f32 %v1903, 1.0
        %v2069 = vlog2.pop %v2068
        %v2070 = vmul.f32 %v2069, 0.6931472
        %v2071 = vmul.f32 -0.5, %v1903
        %v2072 = vadd.f32 %v2071, 1.0
        %v2073 = vmul.f32 %v2072, %v1903
        %v2074 = vand.u32 2147483647, %v1903
        %vm2075 = vcmp.lt.f32.partialorder %v2074, 0.0004427343
        %v2076 = vsel %vm2075, %v2073, %v2070
        %v2077 = vadd.f32 %v1905, 1.0
        %v2078 = vlog2.pop %v2077
        %v2079 = vmul.f32 %v2078, 0.6931472
        %v2080 = vmul.f32 -0.5, %v1905
        %v2081 = vadd.f32 %v2080, 1.0
        %v2082 = vmul.f32 %v2081, %v1905
        %v2083 = vand.u32 2147483647, %v1905
        %vm2084 = vcmp.lt.f32.partialorder %v2083, 0.0004427343
        %v2085 = vsel %vm2084, %v2082, %v2079
        %v2086 = vmul.f32 %v1914, 0.01
        %v2087 = vmul.f32 %v1923, 0.01
        %v2088 = vmul.f32 %v1932, 0.01
        %v2089 = vmul.f32 %v1941, 0.01
        %v2090 = vmul.f32 %v1950, 0.01
        %v2091 = vmul.f32 %v1959, 0.01
        %v2092 = vmul.f32 %v1968, 0.01
        %v2093 = vmul.f32 %v1977, 0.01
        %v2094 = vmul.f32 %v1986, 0.01
        %v2095 = vmul.f32 %v1995, 0.01
        %v2096 = vmul.f32 %v2004, 0.01
        %v2097 = vmul.f32 %v2013, 0.01
        %v2098 = vmul.f32 %v2022, 0.01
        %v2099 = vmul.f32 %v2031, 0.01
        %v2100 = vmul.f32 %v2040, 0.01
        %v2101 = vmul.f32 %v2049, 0.01
        %v2102 = vmul.f32 %v2058, 0.01
        %v2103 = vmul.f32 %v2067, 0.01
        %v2104 = vmul.f32 %v2076, 0.01
        %v2105 = vmul.f32 %v2085, 0.01
        %v2106 = vsel %vm1846, %v1683, %v2086
        %v2107 = vsel %vm1847, %v1685, %v2087
        %v2108 = vsel %vm1848, %v1778, %v2088
        %v2109 = vsel %vm1849, %v1780, %v2089
        %v2110 = vsel %vm1850, %v1689, %v2090
        %v2111 = vsel %vm1851, %v1691, %v2091
        %v2112 = vsel %vm1852, %v1784, %v2092
        %v2113 = vsel %vm1853, %v1786, %v2093
        %v2114 = vsel %vm1854, %v1695, %v2094
        %v2115 = vsel %vm1855, %v1697, %v2095
        %v2116 = vsel %vm1856, %v1790, %v2096
        %v2117 = vsel %vm1857, %v1792, %v2097
        %v2118 = vsel %vm1858, %v1701, %v2098
        %v2119 = vsel %vm1859, %v1703, %v2099
        %v2120 = vsel %vm1860, %v1796, %v2100
        %v2121 = vsel %vm1861, %v1798, %v2101
        %v2122 = vsel %vm1862, %v1707, %v2102
        %v2123 = vsel %vm1863, %v1709, %v2103
        %v2124 = vsel %vm1864, %v1802, %v2104
        %v2125 = vsel %vm1865, %v1804, %v2105
        %2126 = vst [vmem:[#allocation2 + $0x20] sm:$0xff] %v2106
        %2127 = vst [vmem:[#allocation2 + $0x28] sm:$0xff] %v2107
        %2128 = vst [vmem:[#allocation2 + $0x30] sm:$0xff] %v2108
        %2129 = vst [vmem:[#allocation2 + $0x38] sm:$0xff] %v2109
        %2130 = vst [vmem:[#allocation2 + $0x40] sm:$0xff] %v2110
        %2131 = vst [vmem:[#allocation2 + $0x48] sm:$0xff] %v2111
        %2132 = vst [vmem:[#allocation2 + $0x50] sm:$0xff] %v2112
        %2133 = vst [vmem:[#allocation2 + $0x58] sm:$0xff] %v2113
        %2134 = vst [vmem:[#allocation2 + $0x60] sm:$0xff] %v2114
        %2135 = vst [vmem:[#allocation2 + $0x68] sm:$0xff] %v2115
        %2136 = vst [vmem:[#allocation2 + $0x70] sm:$0xff] %v2116
        %2137 = vst [vmem:[#allocation2 + $0x78] sm:$0xff] %v2117
        %2138 = vst [vmem:[#allocation2 + $0x80] sm:$0xff] %v2118
        %2139 = vst [vmem:[#allocation2 + $0x88] sm:$0xff] %v2119
        %2140 = vst [vmem:[#allocation2 + $0x90] sm:$0xff] %v2120
        %2141 = vst [vmem:[#allocation2 + $0x98] sm:$0xff] %v2121
        %2142 = vst [vmem:[#allocation2 + $0xa0] sm:$0xff] %v2122
        %2143 = vst [vmem:[#allocation2 + $0xa8] sm:$0xff] %v2123
        %2144 = vst [vmem:[#allocation2 + $0xb0] sm:$0xff] %v2124
        %2145 = vst [vmem:[#allocation2 + $0xb8] sm:$0xff] %v2125
        %v2146 = vld [vmem:[%s1 + $0x18] ss:$0 sm:$0xff]
        %v2147 = vld [vmem:[%s2] sm:$0x1]
        %v2148 = vld [vmem:[#allocation2] sm:$0xff]
        %v2149 = vld [vmem:[#allocation2 + $0x8] sm:$0xff]
        %v2150 = vld [vmem:[#allocation2 + $0x10] sm:$0xff]
        %v2151 = vld [vmem:[#allocation2 + $0x18] sm:$0xff]
        %v2152 = vld [vmem:[#allocation2 + $0x20] sm:$0xff]
        %v2153 = vld [vmem:[#allocation2 + $0x28] sm:$0xff]
        %v2154 = vld [vmem:[#allocation2 + $0x30] sm:$0xff]
        %v2155 = vld [vmem:[#allocation2 + $0x38] sm:$0xff]
        %v2156 = vld [vmem:[#allocation2 + $0x40] sm:$0xff]
        %v2157 = vld [vmem:[#allocation2 + $0x48] sm:$0xff]
        %v2158 = vld [vmem:[#allocation2 + $0x50] sm:$0xff]
        %v2159 = vld [vmem:[#allocation2 + $0x58] sm:$0xff]
        %v2160 = vld [vmem:[#allocation2 + $0x60] sm:$0xff]
        %v2161 = vld [vmem:[#allocation2 + $0x68] sm:$0xff]
        %v2162 = vld [vmem:[#allocation2 + $0x70] sm:$0xff]
        %v2163 = vld [vmem:[#allocation2 + $0x78] sm:$0xff]
        %v2164 = vld [vmem:[#allocation2 + $0x80] sm:$0xff]
        %v2165 = vld [vmem:[#allocation2 + $0x88] sm:$0xff]
        %v2166 = vld [vmem:[#allocation2 + $0x90] sm:$0xff]
        %v2167 = vld [vmem:[#allocation2 + $0x98] sm:$0xff]
        %v2168 = vld [vmem:[#allocation2 + $0xa0] sm:$0xff]
        %v2169 = vld [vmem:[#allocation2 + $0xa8] sm:$0xff]
        %v2170 = vld [vmem:[#allocation2 + $0xb0] sm:$0xff]
        %v2171 = vld [vmem:[#allocation2 + $0xb8] sm:$0xff]
        %2173 = vset.pattern.permute.xlu0 3
        %2174 = vperm.xlu0 %2173, %v2147
        %v2175 = vpop.permute.xlu0 %2174
        %vm2177 = vcmask 392192
        %v2179 = vsel %vm2177, %v2146, 0
        %2181 = vmatprep.subr.mxu0 0.0
        %2182 = vmatpush1.msra.mxu0 0.0
        %2183 = vmatprep.subr.mxu0 0.0
        %2184 = vmatpush1.msra.mxu0 0.0
        %2185 = vmatprep.subr.mxu0 0.0
        %2186 = vmatpush1.msra.mxu0 0.0
        %2187 = vmatprep.subr.mxu0 0.0
        %2188 = vmatpush1.msra.mxu0 0.0
        %2189 = vmatprep.subr.mxu0 0.0
        %2190 = vmatpush1.msra.mxu0 0.0
        %2191 = vmatprep.subr.mxu0 0.0
        %2192 = vmatpush1.msra.mxu0 0.0
        %2193 = vmatprep.subr.mxu0 0.0
        %2194 = vmatpush1.msra.mxu0 0.0
        %2195 = vmatprep.subr.mxu0 0.0
        %2196 = vmatpush1.msra.mxu0 0.0
        %2197 = vmatprep.subr.mxu0 0.0
        %2198 = vmatpush1.msra.mxu0 0.0
        %2199 = vmatprep.subr.mxu0 0.0
        %2200 = vmatpush1.msra.mxu0 0.0
        %2201 = vmatprep.subr.mxu0 %v2169
        %2202 = vmatpush1.msra.mxu0 %v2168
        %2203 = vmatprep.subr.mxu0 %v2165
        %2204 = vmatpush1.msra.mxu0 %v2164
        %2205 = vmatprep.subr.mxu0 %v2161
        %2206 = vmatpush1.msra.mxu0 %v2160
        %2207 = vmatprep.subr.mxu0 %v2157
        %2208 = vmatpush1.msra.mxu0 %v2156
        %2209 = vmatprep.subr.mxu0 %v2153
        %2210 = vmatpush1.msra.mxu0 %v2152
        %2211 = vmatprep.subr.mxu0 %v2149
        %2212 = vmatpush1.msra.mxu0 %v2148
        %2213 = vmatprep.subr.mxu0 0.0
        %2214 = vmatpush2.msra.mxu0 0.0
        %2215 = vmatprep.subr.mxu0 0.0
        %2216 = vmatpush2.msra.mxu0 0.0
        %2217 = vmatprep.subr.mxu0 0.0
        %2218 = vmatpush2.msra.mxu0 0.0
        %2219 = vmatprep.subr.mxu0 0.0
        %2220 = vmatpush2.msra.mxu0 0.0
        %2221 = vmatprep.subr.mxu0 0.0
        %2222 = vmatpush2.msra.mxu0 0.0
        %2223 = vmatprep.subr.mxu0 0.0
        %2224 = vmatpush2.msra.mxu0 0.0
        %2225 = vmatprep.subr.mxu0 0.0
        %2226 = vmatpush2.msra.mxu0 0.0
        %2227 = vmatprep.subr.mxu0 0.0
        %2228 = vmatpush2.msra.mxu0 0.0
        %2229 = vmatprep.subr.mxu0 0.0
        %2230 = vmatpush2.msra.mxu0 0.0
        %2231 = vmatprep.subr.mxu0 0.0
        %2232 = vmatpush2.msra.mxu0 0.0
        %2233 = vmatprep.subr.mxu0 0.0
        %2234 = vmatpush2.msra.mxu0 0.0
        %2235 = vmatprep.subr.mxu0 0.0
        %2236 = vmatpush2.msra.mxu0 0.0
        %2237 = vmatprep.subr.mxu0 0.0
        %2238 = vmatpush2.msra.mxu0 0.0
        %2239 = vmatprep.subr.mxu0 0.0
        %2240 = vmatpush2.msra.mxu0 0.0
        %2241 = vmatprep.subr.mxu0 0.0
        %2242 = vmatpush2.msra.mxu0 0.0
        %2243 = vmatprep.subr.mxu0 0.0
        %2244 = vmatpush2.msra.mxu0 0.0
        %2245 = vmatprep.mubr.f32.mxu0 0.0
        %2246 = vmatmul.mubr.f32.gmra.mxu0 %v2179
        %v2247 = vpop.f32.mrf.mxu0
        %v2248 = vadd.f32 %v2175, %v2247
        %v2249 = vpop.f32.mrf.mxu0
        %v2250 = vadd.f32 %v2175, %v2249
        %2251 = vdwg.mxu0
        %2252 = vmatprep.subr.mxu0 0.0
        %2253 = vmatpush1.msra.mxu0 0.0
        %2254 = vmatprep.subr.mxu0 0.0
        %2255 = vmatpush1.msra.mxu0 0.0
        %2256 = vmatprep.subr.mxu0 0.0
        %2257 = vmatpush1.msra.mxu0 0.0
        %2258 = vmatprep.subr.mxu0 0.0
        %2259 = vmatpush1.msra.mxu0 0.0
        %2260 = vmatprep.subr.mxu0 0.0
        %2261 = vmatpush1.msra.mxu0 0.0
        %2262 = vmatprep.subr.mxu0 0.0
        %2263 = vmatpush1.msra.mxu0 0.0
        %2264 = vmatprep.subr.mxu0 0.0
        %2265 = vmatpush1.msra.mxu0 0.0
        %2266 = vmatprep.subr.mxu0 0.0
        %2267 = vmatpush1.msra.mxu0 0.0
        %2268 = vmatprep.subr.mxu0 0.0
        %2269 = vmatpush1.msra.mxu0 0.0
        %2270 = vmatprep.subr.mxu0 0.0
        %2271 = vmatpush1.msra.mxu0 0.0
        %2272 = vmatprep.subr.mxu0 %v2171
        %2273 = vmatpush1.msra.mxu0 %v2170
        %2274 = vmatprep.subr.mxu0 %v2167
        %2275 = vmatpush1.msra.mxu0 %v2166
        %2276 = vmatprep.subr.mxu0 %v2163
        %2277 = vmatpush1.msra.mxu0 %v2162
        %2278 = vmatprep.subr.mxu0 %v2159
        %2279 = vmatpush1.msra.mxu0 %v2158
        %2280 = vmatprep.subr.mxu0 %v2155
        %2281 = vmatpush1.msra.mxu0 %v2154
        %2282 = vmatprep.subr.mxu0 %v2151
        %2283 = vmatpush1.msra.mxu0 %v2150
        %2284 = vmatprep.subr.mxu0 0.0
        %2285 = vmatpush2.msra.mxu0 0.0
        %2286 = vmatprep.subr.mxu0 0.0
        %2287 = vmatpush2.msra.mxu0 0.0
        %2288 = vmatprep.subr.mxu0 0.0
        %2289 = vmatpush2.msra.mxu0 0.0
        %2290 = vmatprep.subr.mxu0 0.0
        %2291 = vmatpush2.msra.mxu0 0.0
        %2292 = vmatprep.subr.mxu0 0.0
        %2293 = vmatpush2.msra.mxu0 0.0
        %2294 = vmatprep.subr.mxu0 0.0
        %2295 = vmatpush2.msra.mxu0 0.0
        %2296 = vmatprep.subr.mxu0 0.0
        %2297 = vmatpush2.msra.mxu0 0.0
        %2298 = vmatprep.subr.mxu0 0.0
        %2299 = vmatpush2.msra.mxu0 0.0
        %2300 = vmatprep.subr.mxu0 0.0
        %2301 = vmatpush2.msra.mxu0 0.0
        %2302 = vmatprep.subr.mxu0 0.0
        %2303 = vmatpush2.msra.mxu0 0.0
        %2304 = vmatprep.subr.mxu0 0.0
        %2305 = vmatpush2.msra.mxu0 0.0
        %2306 = vmatprep.subr.mxu0 0.0
        %2307 = vmatpush2.msra.mxu0 0.0
        %2308 = vmatprep.subr.mxu0 0.0
        %2309 = vmatpush2.msra.mxu0 0.0
        %2310 = vmatprep.subr.mxu0 0.0
        %2311 = vmatpush2.msra.mxu0 0.0
        %2312 = vmatprep.subr.mxu0 0.0
        %2313 = vmatpush2.msra.mxu0 0.0
        %2314 = vmatprep.subr.mxu0 0.0
        %2315 = vmatpush2.msra.mxu0 0.0
        %2316 = vmatprep.mubr.f32.mxu0 0.0
        %2317 = vmatmul.mubr.f32.gmra.mxu0 %v2179
        %v2318 = vpop.f32.mrf.mxu0
        %v2319 = vadd.f32 %v2175, %v2318
        %v2320 = vpop.f32.mrf.mxu0
        %v2321 = vadd.f32 %v2175, %v2320
        %2322 = vdwg.mxu0
        %v2327 = vcombine.low %v2248, %v2250
        %v2328 = vcombine.low %v2319, %v2321
        %v2330 = vunpack.c.l.s4 1966171168
        %v2331 = vunpack.c.0.s8 %v2330
        %v2332 = vlaneseq
        %v2333 = vshrl.u32 %v2332, 7
        %v2334 = vsub.s32 %v2331, %v2333
        %v2335 = vrot.slane %v2327, %v2334
        %v2337 = vunpack.c.l.s4 1966171168
        %v2338 = vunpack.c.0.s8 %v2337
        %v2339 = vlaneseq
        %v2340 = vshrl.u32 %v2339, 7
        %v2341 = vsub.s32 %v2338, %v2340
        %v2342 = vrot.slane %v2328, %v2341
        %v2343 = vcombine.low %v2335, %v2342
        %v2345 = vunpack.c.l.s4 1966171168
        %v2346 = vunpack.c.0.s8 %v2345
        %v2347 = vlaneseq
        %v2348 = vshrl.u32 %v2347, 7
        %v2349 = vsub.s32 %v2346, %v2348
        %v2350 = vrot.slane %v2343, %v2349
        %v2352 = vlaneseq
        %vm2353 = vcmp.ge.s32.totalorder %v2352, 0
        %vm2354 = vcmp.lt.s32.totalorder %v2352, 512
        %vm2355 = vmand %vm2353, %vm2354
        %2356 = vst.msk [vmem:[%s164] sm:$0xf] %vm2355, %v2350
        %s2357 = sand.u32 %s93, 1
        %s2358 = scalar_lea.sflag [#allocation4], %s2357
        %s2359 = sand.u32 %s93, 1
        %s2360 = smul.addr %s2359, 4
        %s2361 = scalar_lea.vmem [#allocation3], %s2360
        // Predicated region
        $region33: #{tpu_custom_call.1} parent=31 // pred_check
          %p2362 = pneg %p103
        $region34: #{tpu_custom_call.1} parent=31 // pred_check_branch
          %2364 = sbr.rel (%p2362) target = $region36
        $region35: #{tpu_custom_call.1} parent=31 // pred_region
          %s2365 = smul.u32 4, %s17
          %s2367 = ssub.s32 64, 64
          %2368 = vsyncadd %s2358, %s2367
          %s2369 = smul.addr %s2365, 16
          %s2370 = scalar_lea.hbm %s3, %s2369
          %s2372 = sshll.u32 %s2361, 4
          %s2373 = int_to_ptr.vmem [resolvable:$true] %s2372
          %2375 = dma.vmem_to_hbm [thread:$0]  %s2373, 64, %s2370, %s2358
        $region36: #{tpu_custom_call.1} parent=31 // pred_fallthru
          _
      $region32: #{tpu_custom_call.1} parent=5 // pred_fallthru
        _
      %p2376 = scmp.le.s32.totalorder 2, %s12
      // Predicated region
      $region37: #{tpu_custom_call.1} parent=5 // pred_check
        %p2377 = pneg %p2376
      $region38: #{tpu_custom_call.1} parent=5 // pred_check_branch
        %2379 = sbr.rel (%p2377) target = $region40
      $region39: #{tpu_custom_call.1} parent=5 // pred_region
        %s2380 = ssub.s32 %s12, 2
        // Predicated region
        $region41: #{tpu_custom_call.1} parent=39 // pred_check
          %p2381 = pneg %p109
        $region42: #{tpu_custom_call.1} parent=39 // pred_check_branch
          %2383 = sbr.rel (%p2381) target = $region44
        $region43: #{tpu_custom_call.1} parent=39 // pred_region
          %s2384 = sand.u32 %s94, 1
          %s2385 = scalar_lea.sflag [#allocation4], %s2384
          %s2386 = sand.u32 %s94, 1
          %s2387 = smul.addr %s2386, 4
          %s2388 = scalar_lea.vmem [#allocation3], %s2387
          %2389 = dma.done %s2385, 64
        $region44: #{tpu_custom_call.1} parent=39 // pred_fallthru
          _
      $region40: #{tpu_custom_call.1} parent=5 // pred_fallthru
        _
    $region6: #{tpu_custom_call.1} parent=1 // loop_footer
      %s16 = sadd.s32 1, %s12
    $region7: #{tpu_custom_call.1} parent=1 // loop_footer_branch
      %11 = sbr.rel target = $region3
    $region8: #{tpu_custom_call.1} parent=1 // loop_exit
      _
    %2390 = vsyncpa [#allocation4], 1
    %s2391 = scalar_lea.sflag [#allocation4], 1
    %2392 = vsyncpa %s2391, 1

</llo_original>
